<compile_context>
chip_gen: v6e
topology: v6e:2x2x1
jax: 0.10.0
libtpu: 0.0.40
codegen_flags: <defaults>
</compile_context>

<pallas_src>
import functools

import jax
import jax.numpy as jnp
from jax.experimental import pallas as pl
from jax.experimental.pallas import tpu as pltpu


# ----------------------------------------------------------------------------
# Single fused Pallas kernel: the entire MGCN forward.
# ----------------------------------------------------------------------------
def mgcn_kernel(
    v_feat_ref, t_feat_ref,
    w_img_ref, b_img_ref, w_txt_ref, b_txt_ref,
    user_ref, item_ref,
    wgv_ref, bgv_ref, wgt_ref, bgt_ref,
    r_ref, rt_ref, image_adj_ref, text_adj_ref,
    wq1_ref, bq1_ref, wq2t_ref,
    wgip_ref, bgip_ref, wgtp_ref, bgtp_ref,
    all_ref, side_ref, content_ref,
    img_emb_sc, txt_emb_sc,
    *, num_user, num_item,
):
    f32 = jnp.float32
    bf16 = jnp.bfloat16

    # --- modality feature transforms (image_trs / text_trs) -----------------
    image_feats = (
        jnp.dot(v_feat_ref[...], w_img_ref[...], preferred_element_type=f32)
        + b_img_ref[...])
    text_feats = (
        jnp.dot(t_feat_ref[...], w_txt_ref[...], preferred_element_type=f32)
        + b_txt_ref[...])

    # --- gated modality item embeddings (item_emb * sigmoid(gate(feats))) ---
    item_emb = item_ref[...]
    img_item = item_emb * jax.nn.sigmoid(
        jnp.dot(image_feats.astype(bf16), wgv_ref[...],
                preferred_element_type=f32) + bgv_ref[...])
    txt_item = item_emb * jax.nn.sigmoid(
        jnp.dot(text_feats.astype(bf16), wgt_ref[...],
                preferred_element_type=f32) + bgt_ref[...])

    # --- user-item graph propagation (n_ui_layers=2, mean of 3 layer outs) --
    # Bipartite block structure of the sym-normalized adjacency:
    #   e_users <- R_norm   @ e_items
    #   e_items <- R_norm^T @ e_users
    r = r_ref[...]
    rt = rt_ref[...]
    e0_u = user_ref[...]
    e0_i = item_emb
    e1_u = jnp.dot(r, e0_i.astype(bf16), preferred_element_type=f32)
    e1_i = jnp.dot(rt, e0_u.astype(bf16), preferred_element_type=f32)
    e2_u = jnp.dot(r, e1_i.astype(bf16), preferred_element_type=f32)
    e2_i = jnp.dot(rt, e1_u.astype(bf16), preferred_element_type=f32)
    content_ref[:num_user, :] = (e0_u + e1_u + e2_u) / 3.0
    content_ref[num_user:, :] = (e0_i + e1_i + e2_i) / 3.0

    # --- modality item-item propagation (n_layers=1) -------------------------
    # TODO(synk): at real scale keep these graphs sparse (k-NN gather via
    # scalar-prefetched indices) instead of dense (I x I) matmuls.
    img_item = jnp.dot(image_adj_ref[...], img_item.astype(bf16),
                       preferred_element_type=f32)
    txt_item = jnp.dot(text_adj_ref[...], txt_item.astype(bf16),
                       preferred_element_type=f32)

    # --- user-side modality embeddings via normalized R ----------------------
    # Write [user; item] halves into VMEM slabs at 8-aligned row offsets
    # (no jnp.concatenate -> no extra VMEM copies of the (N, D) slabs).
    img_emb_sc[:num_user, :] = jnp.dot(r, img_item.astype(bf16),
                                       preferred_element_type=f32)
    img_emb_sc[num_user:, :] = img_item
    txt_emb_sc[:num_user, :] = jnp.dot(r, txt_item.astype(bf16),
                                       preferred_element_type=f32)
    txt_emb_sc[num_user:, :] = txt_item

    img_emb = img_emb_sc[...]
    txt_emb = txt_emb_sc[...]

    # --- query_common attention: two matmuls against the resident Wq1 --------
    h_i = jnp.tanh(
        jnp.dot(img_emb.astype(bf16), wq1_ref[...], preferred_element_type=f32)
        + bq1_ref[...])
    h_t = jnp.tanh(
        jnp.dot(txt_emb.astype(bf16), wq1_ref[...], preferred_element_type=f32)
        + bq1_ref[...])
    # Wq2 passed transposed as (1, D): score = sum(h * wq2, lanes)
    att_i = jnp.sum(h_i * wq2t_ref[...], axis=-1, keepdims=True)   # (N, 1)
    att_t = jnp.sum(h_t * wq2t_ref[...], axis=-1, keepdims=True)   # (N, 1)

    # --- softmax over two scores == sigmoid of the difference (exact) --------
    w_i = jax.nn.sigmoid(att_i - att_t)
    w_t = 1.0 - w_i
    common = w_i * img_emb + w_t * txt_emb

    # --- preference gates on content embeddings ------------------------------
    content = content_ref[...]
    img_prefer = jax.nn.sigmoid(
        jnp.dot(content.astype(bf16), wgip_ref[...],
                preferred_element_type=f32) + bgip_ref[...])
    txt_prefer = jax.nn.sigmoid(
        jnp.dot(content.astype(bf16), wgtp_ref[...],
                preferred_element_type=f32) + bgtp_ref[...])

    # --- fused combine: gating, side_embeds, all_embeds ----------------------
    side = (img_prefer * (img_emb - common)
            + txt_prefer * (txt_emb - common)
            + common) / 3.0
    side_ref[...] = side
    all_ref[...] = content + side


# ----------------------------------------------------------------------------
# Wrapper: one pallas_call, lane-padded, bf16 matmul operands, f32 tail.
# ----------------------------------------------------------------------------
def _pad_lanes(x, target):
    pad = target - x.shape[-1]
    if pad <= 0:
        return x
    return jnp.pad(x, ((0, 0), (0, pad)))


def mgcn_forward(params, adjs, num_user, num_item, dim_E):
    p = params
    R_norm, image_adj, text_adj = adjs
    N = num_user + num_item
    f32 = jnp.float32
    bf16 = jnp.bfloat16

    # Lane-pad the feature dims to multiples of 128 (exact: pads are zeros).
    Dp = ((dim_E + 127) // 128) * 128
    Vp = ((p["v_feat"].shape[1] + 127) // 128) * 128
    Tp = ((p["t_feat"].shape[1] + 127) // 128) * 128

    def pad_w(w, rows, cols):  # zero-pad a (r, c) weight to (rows, cols)
        return jnp.pad(w, ((0, rows - w.shape[0]), (0, cols - w.shape[1])))

    inputs = (
        _pad_lanes(p["v_feat"], Vp).astype(bf16),
        _pad_lanes(p["t_feat"], Tp).astype(bf16),
        pad_w(p["W_img"], Vp, Dp).astype(bf16), _pad_lanes(p["b_img"], Dp),
        pad_w(p["W_txt"], Tp, Dp).astype(bf16), _pad_lanes(p["b_txt"], Dp),
        _pad_lanes(p["user_emb"], Dp).astype(f32),
        _pad_lanes(p["item_emb"], Dp).astype(f32),
        pad_w(p["Wgv"], Dp, Dp).astype(bf16), _pad_lanes(p["bgv"], Dp),
        pad_w(p["Wgt"], Dp, Dp).astype(bf16), _pad_lanes(p["bgt"], Dp),
        R_norm.astype(bf16), R_norm.T.astype(bf16),
        image_adj.astype(bf16), text_adj.astype(bf16),
        pad_w(p["Wq1"], Dp, Dp).astype(bf16), _pad_lanes(p["bq1"], Dp),
        _pad_lanes(p["Wq2"].T, Dp).astype(f32),
        pad_w(p["Wgip"], Dp, Dp).astype(bf16), _pad_lanes(p["bgip"], Dp),
        pad_w(p["Wgtp"], Dp, Dp).astype(bf16), _pad_lanes(p["bgtp"], Dp),
    )

    kernel = functools.partial(mgcn_kernel, num_user=num_user, num_item=num_item)

    vmem_spec = pl.BlockSpec(memory_space=pltpu.MemorySpace.VMEM)
    out_shapes = (
        jax.ShapeDtypeStruct((N, Dp), f32),   # all_embeds (lane-padded)
        jax.ShapeDtypeStruct((N, Dp), f32),   # side_embeds
        jax.ShapeDtypeStruct((N, Dp), f32),   # content_embeds
    )

    all_p, side_p, content_p = pl.pallas_call(
        kernel,
        in_specs=[vmem_spec] * len(inputs),
        out_specs=(vmem_spec, vmem_spec, vmem_spec),
        out_shape=out_shapes,
        scratch_shapes=[pltpu.VMEM((N, Dp), f32),    # img_emb slab
                        pltpu.VMEM((N, Dp), f32)],   # txt_emb slab
        compiler_params=pltpu.CompilerParams(
            # Tiny working set; 32 MiB is within scoped VMEM on v5e/v6e/v7x.
            vmem_limit_bytes=32 * 1024 * 1024),
    )(*inputs)

    # Strip lane padding outside the kernel (cheap XLA slices).
    all_embeds = all_p[:, :dim_E]
    side_embeds = side_p[:, :dim_E]
    content_embeds = content_p[:, :dim_E]
    users = all_embeds[:num_user]
    items = all_embeds[num_user:]
    return users, items, side_embeds, content_embeds


# ----------------------------------------------------------------------------
# Plain-JAX glue: deterministic parameter init and graph construction
# (mirrors __init__ of MGCN; not part of the forward hot path).
# ----------------------------------------------------------------------------
def xavier_uniform(key, shape):
    fan_in, fan_out = shape[0], shape[1]
    limit = jnp.sqrt(6.0 / (fan_in + fan_out))
    return jax.random.uniform(key, shape, jnp.float32, -limit, limit)


def build_sim(feat):
    n = feat / jnp.linalg.norm(feat, axis=-1, keepdims=True)
    return n @ n.T


def build_knn_sym_adj(feat, knn_k):
    """Dense equivalent of build_knn_normalized_graph(..., norm_type='sym')."""
    sim = build_sim(feat)
    vals, inds = jax.lax.top_k(sim, knn_k)
    adj = jnp.zeros_like(sim)
    rows = jnp.arange(sim.shape[0])[:, None]
    adj = adj.at[rows, inds].set(vals)
    rowsum = adj.sum(-1)
    d = jnp.where(rowsum > 0, rowsum ** -0.5, 0.0)
    return d[:, None] * adj * d[None, :]


def build_norm_adj(R):
    """Sym-normalized bipartite adjacency (get_adj_mat) -> R_norm block only."""
    U, I = R.shape
    adj = jnp.zeros((U + I, U + I), jnp.float32)
    adj = adj.at[:U, U:].set(R)
    adj = adj.at[U:, :U].set(R.T)
    rowsum = adj.sum(1)
    rowsum = jnp.where(rowsum == 0.0, 1e-16, rowsum)
    d_inv = rowsum ** -0.5
    d_inv = jnp.where(jnp.isinf(d_inv), 0.0, d_inv)
    norm_adj = d_inv[:, None] * adj * d_inv[None, :]
    # norm_adj is symmetric with zero diagonal blocks; its full action is
    # captured by the off-diagonal block R_norm (and its transpose).
    return norm_adj[:U, U:]


# ----------------------------------------------------------------------------
# Pure-JAX f32 reference of the forward (for a loose numerical cross-check).
# ----------------------------------------------------------------------------
def mgcn_reference(p, adjs, num_user, num_item):
    R_norm, image_adj, text_adj = adjs
    image_feats = p["v_feat"] @ p["W_img"] + p["b_img"]
    text_feats = p["t_feat"] @ p["W_txt"] + p["b_txt"]
    item_emb = p["item_emb"]
    img_item = item_emb * jax.nn.sigmoid(image_feats @ p["Wgv"] + p["bgv"])
    txt_item = item_emb * jax.nn.sigmoid(text_feats @ p["Wgt"] + p["bgt"])

    e0 = jnp.concatenate([p["user_emb"], item_emb], axis=0)
    norm_adj = jnp.zeros((e0.shape[0], e0.shape[0]), jnp.float32)
    norm_adj = norm_adj.at[:num_user, num_user:].set(R_norm)
    norm_adj = norm_adj.at[num_user:, :num_user].set(R_norm.T)
    e1 = norm_adj @ e0
    e2 = norm_adj @ e1
    content = (e0 + e1 + e2) / 3.0

    img_item = image_adj @ img_item
    txt_item = text_adj @ txt_item
    img_emb = jnp.concatenate([R_norm @ img_item, img_item], axis=0)
    txt_emb = jnp.concatenate([R_norm @ txt_item, txt_item], axis=0)

    def q(x):
        return jnp.tanh(x @ p["Wq1"] + p["bq1"]) @ p["Wq2"]
    att = jnp.concatenate([q(img_emb), q(txt_emb)], axis=-1)
    w = jax.nn.softmax(att, axis=-1)
    common = w[:, :1] * img_emb + w[:, 1:] * txt_emb

    img_prefer = jax.nn.sigmoid(content @ p["Wgip"] + p["bgip"])
    txt_prefer = jax.nn.sigmoid(content @ p["Wgtp"] + p["bgtp"])
    side = (img_prefer * (img_emb - common)
            + txt_prefer * (txt_emb - common) + common) / 3.0
    all_embeds = content + side
    return all_embeds[:num_user], all_embeds[num_user:], side, content


# ----------------------------------------------------------------------------
# Main
# ----------------------------------------------------------------------------
if __name__ == "__main__":
    key = jax.random.PRNGKey(0)
    num_user, num_item, dim_E = 8, 16, 32
    v_dim, t_dim = 64, 48
    knn_k = 10
    f32 = jnp.float32

    keys = jax.random.split(key, 20)

    params = {
        "user_emb": xavier_uniform(keys[0], (num_user, dim_E)),
        "item_emb": xavier_uniform(keys[1], (num_item, dim_E)),
        "v_feat": jax.random.normal(keys[2], (num_item, v_dim), f32),
        "t_feat": jax.random.normal(keys[3], (num_item, t_dim), f32),
        "W_img": xavier_uniform(keys[4], (v_dim, dim_E)),
        "b_img": jnp.zeros((1, dim_E), f32),
        "W_txt": xavier_uniform(keys[5], (t_dim, dim_E)),
        "b_txt": jnp.zeros((1, dim_E), f32),
        "Wgv": xavier_uniform(keys[6], (dim_E, dim_E)),
        "bgv": jnp.zeros((1, dim_E), f32),
        "Wgt": xavier_uniform(keys[7], (dim_E, dim_E)),
        "bgt": jnp.zeros((1, dim_E), f32),
        "Wq1": xavier_uniform(keys[8], (dim_E, dim_E)),
        "bq1": jnp.zeros((1, dim_E), f32),
        "Wq2": xavier_uniform(keys[9], (dim_E, 1)),
        "Wgip": xavier_uniform(keys[10], (dim_E, dim_E)),
        "bgip": jnp.zeros((1, dim_E), f32),
        "Wgtp": xavier_uniform(keys[11], (dim_E, dim_E)),
        "bgtp": jnp.zeros((1, dim_E), f32),
    }

    # Random binary user-item interaction matrix -> normalized R block.
    R = (jax.random.uniform(keys[12], (num_user, num_item)) < 0.3).astype(f32)
    R_norm = build_norm_adj(R)

    # kNN sym-normalized modality item-item graphs (dense equivalent of the
    # sparse COO graphs built in __init__; kept dense only at toy size).
    image_adj = build_knn_sym_adj(params["v_feat"], knn_k)
    text_adj = build_knn_sym_adj(params["t_feat"], knn_k)

    adjs = (R_norm, image_adj, text_adj)

    users, items, side, content = mgcn_forward(
        params, adjs, num_user, num_item, dim_E)
    jax.block_until_ready((users, items, side, content))

    # Shapes / finiteness.
    assert users.shape == (num_user, dim_E)
    assert items.shape == (num_item, dim_E)
    assert side.shape == (num_user + num_item, dim_E)
    assert content.shape == (num_user + num_item, dim_E)
    assert bool(jnp.all(jnp.isfinite(users))) and bool(jnp.all(jnp.isfinite(items)))
    assert bool(jnp.all(jnp.isfinite(side))) and bool(jnp.all(jnp.isfinite(content)))

    # Loose numerical cross-check vs f32 reference (kernel uses bf16 MXU
    # operands with f32 accumulation, so allow a generous tolerance).
    ru, ri, rs, rc = mgcn_reference(params, adjs, num_user, num_item)
    max_diff = max(
        float(jnp.max(jnp.abs(users - ru))),
        float(jnp.max(jnp.abs(items - ri))),
        float(jnp.max(jnp.abs(side - rs))),
        float(jnp.max(jnp.abs(content - rc))),
    )
    assert max_diff < 1e-1, f"max abs diff vs reference too large: {max_diff}"

    print("KERNEL_OK")
</pallas_src>

<mosaic_0001>
module attributes {stable_mosaic.version = 11 : i64} {
  func.func @mgcn_kernel(%arg0: memref<16x128xbf16, #tpu.memory_space<vmem>>, %arg1: memref<16x128xbf16, #tpu.memory_space<vmem>>, %arg2: memref<128x128xbf16, #tpu.memory_space<vmem>>, %arg3: memref<1x128xf32, #tpu.memory_space<vmem>>, %arg4: memref<128x128xbf16, #tpu.memory_space<vmem>>, %arg5: memref<1x128xf32, #tpu.memory_space<vmem>>, %arg6: memref<8x128xf32, #tpu.memory_space<vmem>>, %arg7: memref<16x128xf32, #tpu.memory_space<vmem>>, %arg8: memref<128x128xbf16, #tpu.memory_space<vmem>>, %arg9: memref<1x128xf32, #tpu.memory_space<vmem>>, %arg10: memref<128x128xbf16, #tpu.memory_space<vmem>>, %arg11: memref<1x128xf32, #tpu.memory_space<vmem>>, %arg12: memref<8x16xbf16, #tpu.memory_space<vmem>>, %arg13: memref<16x8xbf16, #tpu.memory_space<vmem>>, %arg14: memref<16x16xbf16, #tpu.memory_space<vmem>>, %arg15: memref<16x16xbf16, #tpu.memory_space<vmem>>, %arg16: memref<128x128xbf16, #tpu.memory_space<vmem>>, %arg17: memref<1x128xf32, #tpu.memory_space<vmem>>, %arg18: memref<1x128xf32, #tpu.memory_space<vmem>>, %arg19: memref<128x128xbf16, #tpu.memory_space<vmem>>, %arg20: memref<1x128xf32, #tpu.memory_space<vmem>>, %arg21: memref<128x128xbf16, #tpu.memory_space<vmem>>, %arg22: memref<1x128xf32, #tpu.memory_space<vmem>>, %arg23: memref<24x128xf32, #tpu.memory_space<vmem>>, %arg24: memref<24x128xf32, #tpu.memory_space<vmem>>, %arg25: memref<24x128xf32, #tpu.memory_space<vmem>>, %arg26: memref<24x128xf32, #tpu.memory_space<vmem>>, %arg27: memref<24x128xf32, #tpu.memory_space<vmem>>) attributes {dimension_semantics = [], scalar_prefetch = 0 : i64, scratch_operands = 2 : i64, tpu.core_type = #tpu.core_type<tc>} {
    %c0 = arith.constant 0 : index
    %c0_0 = arith.constant 0 : index
    %0 = vector.load %arg0[%c0, %c0_0] : memref<16x128xbf16, #tpu.memory_space<vmem>>, vector<16x128xbf16>
    %c0_1 = arith.constant 0 : index
    %c0_2 = arith.constant 0 : index
    %1 = vector.load %arg2[%c0_1, %c0_2] : memref<128x128xbf16, #tpu.memory_space<vmem>>, vector<128x128xbf16>
    %cst = arith.constant dense<0.000000e+00> : vector<16x128xf32>
    %2 = tpu.matmul %0, %1, %cst {dimension_numbers = #tpu.dot_dimension_numbers<[1], [0], [0], [1], [0, 0, 1, 1], [], []>} : vector<16x128xbf16>, vector<128x128xbf16>, vector<16x128xf32> -> vector<16x128xf32>
    %c0_3 = arith.constant 0 : index
    %c0_4 = arith.constant 0 : index
    %3 = vector.load %arg3[%c0_3, %c0_4] : memref<1x128xf32, #tpu.memory_space<vmem>>, vector<1x128xf32>
    %4 = vector.broadcast %3 : vector<1x128xf32> to vector<16x128xf32>
    %5 = arith.addf %2, %4 : vector<16x128xf32>
    %c0_5 = arith.constant 0 : index
    %c0_6 = arith.constant 0 : index
    %6 = vector.load %arg1[%c0_5, %c0_6] : memref<16x128xbf16, #tpu.memory_space<vmem>>, vector<16x128xbf16>
    %c0_7 = arith.constant 0 : index
    %c0_8 = arith.constant 0 : index
    %7 = vector.load %arg4[%c0_7, %c0_8] : memref<128x128xbf16, #tpu.memory_space<vmem>>, vector<128x128xbf16>
    %cst_9 = arith.constant dense<0.000000e+00> : vector<16x128xf32>
    %8 = tpu.matmul %6, %7, %cst_9 {dimension_numbers = #tpu.dot_dimension_numbers<[1], [0], [0], [1], [0, 0, 1, 1], [], []>} : vector<16x128xbf16>, vector<128x128xbf16>, vector<16x128xf32> -> vector<16x128xf32>
    %c0_10 = arith.constant 0 : index
    %c0_11 = arith.constant 0 : index
    %9 = vector.load %arg5[%c0_10, %c0_11] : memref<1x128xf32, #tpu.memory_space<vmem>>, vector<1x128xf32>
    %10 = vector.broadcast %9 : vector<1x128xf32> to vector<16x128xf32>
    %11 = arith.addf %8, %10 : vector<16x128xf32>
    %c0_12 = arith.constant 0 : index
    %c0_13 = arith.constant 0 : index
    %12 = vector.load %arg7[%c0_12, %c0_13] : memref<16x128xf32, #tpu.memory_space<vmem>>, vector<16x128xf32>
    %13 = arith.truncf %5 : vector<16x128xf32> to vector<16x128xbf16>
    %c0_14 = arith.constant 0 : index
    %c0_15 = arith.constant 0 : index
    %14 = vector.load %arg8[%c0_14, %c0_15] : memref<128x128xbf16, #tpu.memory_space<vmem>>, vector<128x128xbf16>
    %cst_16 = arith.constant dense<0.000000e+00> : vector<16x128xf32>
    %15 = tpu.matmul %13, %14, %cst_16 {dimension_numbers = #tpu.dot_dimension_numbers<[1], [0], [0], [1], [0, 0, 1, 1], [], []>} : vector<16x128xbf16>, vector<128x128xbf16>, vector<16x128xf32> -> vector<16x128xf32>
    %c0_17 = arith.constant 0 : index
    %c0_18 = arith.constant 0 : index
    %16 = vector.load %arg9[%c0_17, %c0_18] : memref<1x128xf32, #tpu.memory_space<vmem>>, vector<1x128xf32>
    %17 = vector.broadcast %16 : vector<1x128xf32> to vector<16x128xf32>
    %18 = arith.addf %15, %17 : vector<16x128xf32>
    %19 = arith.negf %18 : vector<16x128xf32>
    %20 = math.exp %19 : vector<16x128xf32>
    %cst_19 = arith.constant 1.000000e+00 : f32
    %21 = vector.broadcast %cst_19 : f32 to vector<16x128xf32>
    %22 = arith.addf %21, %20 : vector<16x128xf32>
    %23 = arith.divf %21, %22 : vector<16x128xf32>
    %24 = arith.mulf %12, %23 : vector<16x128xf32>
    %25 = arith.truncf %11 : vector<16x128xf32> to vector<16x128xbf16>
    %c0_20 = arith.constant 0 : index
    %c0_21 = arith.constant 0 : index
    %26 = vector.load %arg10[%c0_20, %c0_21] : memref<128x128xbf16, #tpu.memory_space<vmem>>, vector<128x128xbf16>
    %cst_22 = arith.constant dense<0.000000e+00> : vector<16x128xf32>
    %27 = tpu.matmul %25, %26, %cst_22 {dimension_numbers = #tpu.dot_dimension_numbers<[1], [0], [0], [1], [0, 0, 1, 1], [], []>} : vector<16x128xbf16>, vector<128x128xbf16>, vector<16x128xf32> -> vector<16x128xf32>
    %c0_23 = arith.constant 0 : index
    %c0_24 = arith.constant 0 : index
    %28 = vector.load %arg11[%c0_23, %c0_24] : memref<1x128xf32, #tpu.memory_space<vmem>>, vector<1x128xf32>
    %29 = vector.broadcast %28 : vector<1x128xf32> to vector<16x128xf32>
    %30 = arith.addf %27, %29 : vector<16x128xf32>
    %31 = arith.negf %30 : vector<16x128xf32>
    %32 = math.exp %31 : vector<16x128xf32>
    %cst_25 = arith.constant 1.000000e+00 : f32
    %33 = vector.broadcast %cst_25 : f32 to vector<16x128xf32>
    %34 = arith.addf %33, %32 : vector<16x128xf32>
    %35 = arith.divf %33, %34 : vector<16x128xf32>
    %36 = arith.mulf %12, %35 : vector<16x128xf32>
    %c0_26 = arith.constant 0 : index
    %c0_27 = arith.constant 0 : index
    %37 = vector.load %arg12[%c0_26, %c0_27] : memref<8x16xbf16, #tpu.memory_space<vmem>>, vector<8x16xbf16>
    %c0_28 = arith.constant 0 : index
    %c0_29 = arith.constant 0 : index
    %38 = vector.load %arg13[%c0_28, %c0_29] : memref<16x8xbf16, #tpu.memory_space<vmem>>, vector<16x8xbf16>
    %c0_30 = arith.constant 0 : index
    %c0_31 = arith.constant 0 : index
    %39 = vector.load %arg6[%c0_30, %c0_31] : memref<8x128xf32, #tpu.memory_space<vmem>>, vector<8x128xf32>
    %40 = arith.truncf %12 : vector<16x128xf32> to vector<16x128xbf16>
    %cst_32 = arith.constant dense<0.000000e+00> : vector<8x128xf32>
    %41 = tpu.matmul %37, %40, %cst_32 {dimension_numbers = #tpu.dot_dimension_numbers<[1], [0], [0], [1], [0, 0, 1, 1], [], []>} : vector<8x16xbf16>, vector<16x128xbf16>, vector<8x128xf32> -> vector<8x128xf32>
    %42 = arith.truncf %39 : vector<8x128xf32> to vector<8x128xbf16>
    %cst_33 = arith.constant dense<0.000000e+00> : vector<16x128xf32>
    %43 = tpu.matmul %38, %42, %cst_33 {dimension_numbers = #tpu.dot_dimension_numbers<[1], [0], [0], [1], [0, 0, 1, 1], [], []>} : vector<16x8xbf16>, vector<8x128xbf16>, vector<16x128xf32> -> vector<16x128xf32>
    %44 = arith.truncf %43 : vector<16x128xf32> to vector<16x128xbf16>
    %cst_34 = arith.constant dense<0.000000e+00> : vector<8x128xf32>
    %45 = tpu.matmul %37, %44, %cst_34 {dimension_numbers = #tpu.dot_dimension_numbers<[1], [0], [0], [1], [0, 0, 1, 1], [], []>} : vector<8x16xbf16>, vector<16x128xbf16>, vector<8x128xf32> -> vector<8x128xf32>
    %46 = arith.truncf %41 : vector<8x128xf32> to vector<8x128xbf16>
    %cst_35 = arith.constant dense<0.000000e+00> : vector<16x128xf32>
    %47 = tpu.matmul %38, %46, %cst_35 {dimension_numbers = #tpu.dot_dimension_numbers<[1], [0], [0], [1], [0, 0, 1, 1], [], []>} : vector<16x8xbf16>, vector<8x128xbf16>, vector<16x128xf32> -> vector<16x128xf32>
    %48 = arith.addf %39, %41 : vector<8x128xf32>
    %49 = arith.addf %48, %45 : vector<8x128xf32>
    %cst_36 = arith.constant 3.000000e+00 : f32
    %50 = vector.broadcast %cst_36 : f32 to vector<8x128xf32>
    %51 = arith.divf %49, %50 : vector<8x128xf32>
    %c0_37 = arith.constant 0 : index
    %c0_38 = arith.constant 0 : index
    %52 = vector.load %arg25[%c0_37, %c0_38] : memref<24x128xf32, #tpu.memory_space<vmem>>, vector<8x128xf32>
    tpu.vector_store %arg25[%c0_37, %c0_38], %51 {strides = array<i32>} : memref<24x128xf32, #tpu.memory_space<vmem>>, vector<8x128xf32>,
    %53 = arith.addf %12, %43 : vector<16x128xf32>
    %54 = arith.addf %53, %47 : vector<16x128xf32>
    %cst_39 = arith.constant 3.000000e+00 : f32
    %55 = vector.broadcast %cst_39 : f32 to vector<16x128xf32>
    %56 = arith.divf %54, %55 : vector<16x128xf32>
    %c8 = arith.constant 8 : index
    %c0_40 = arith.constant 0 : index
    %57 = vector.load %arg25[%c8, %c0_40] : memref<24x128xf32, #tpu.memory_space<vmem>>, vector<16x128xf32>
    tpu.vector_store %arg25[%c8, %c0_40], %56 {strides = array<i32>} : memref<24x128xf32, #tpu.memory_space<vmem>>, vector<16x128xf32>,
    %c0_41 = arith.constant 0 : index
    %c0_42 = arith.constant 0 : index
    %58 = vector.load %arg14[%c0_41, %c0_42] : memref<16x16xbf16, #tpu.memory_space<vmem>>, vector<16x16xbf16>
    %59 = arith.truncf %24 : vector<16x128xf32> to vector<16x128xbf16>
    %cst_43 = arith.constant dense<0.000000e+00> : vector<16x128xf32>
    %60 = tpu.matmul %58, %59, %cst_43 {dimension_numbers = #tpu.dot_dimension_numbers<[1], [0], [0], [1], [0, 0, 1, 1], [], []>} : vector<16x16xbf16>, vector<16x128xbf16>, vector<16x128xf32> -> vector<16x128xf32>
    %c0_44 = arith.constant 0 : index
    %c0_45 = arith.constant 0 : index
    %61 = vector.load %arg15[%c0_44, %c0_45] : memref<16x16xbf16, #tpu.memory_space<vmem>>, vector<16x16xbf16>
    %62 = arith.truncf %36 : vector<16x128xf32> to vector<16x128xbf16>
    %cst_46 = arith.constant dense<0.000000e+00> : vector<16x128xf32>
    %63 = tpu.matmul %61, %62, %cst_46 {dimension_numbers = #tpu.dot_dimension_numbers<[1], [0], [0], [1], [0, 0, 1, 1], [], []>} : vector<16x16xbf16>, vector<16x128xbf16>, vector<16x128xf32> -> vector<16x128xf32>
    %64 = arith.truncf %60 : vector<16x128xf32> to vector<16x128xbf16>
    %cst_47 = arith.constant dense<0.000000e+00> : vector<8x128xf32>
    %65 = tpu.matmul %37, %64, %cst_47 {dimension_numbers = #tpu.dot_dimension_numbers<[1], [0], [0], [1], [0, 0, 1, 1], [], []>} : vector<8x16xbf16>, vector<16x128xbf16>, vector<8x128xf32> -> vector<8x128xf32>
    %c0_48 = arith.constant 0 : index
    %c0_49 = arith.constant 0 : index
    %66 = vector.load %arg26[%c0_48, %c0_49] : memref<24x128xf32, #tpu.memory_space<vmem>>, vector<8x128xf32>
    tpu.vector_store %arg26[%c0_48, %c0_49], %65 {strides = array<i32>} : memref<24x128xf32, #tpu.memory_space<vmem>>, vector<8x128xf32>,
    %c8_50 = arith.constant 8 : index
    %c0_51 = arith.constant 0 : index
    %67 = vector.load %arg26[%c8_50, %c0_51] : memref<24x128xf32, #tpu.memory_space<vmem>>, vector<16x128xf32>
    tpu.vector_store %arg26[%c8_50, %c0_51], %60 {strides = array<i32>} : memref<24x128xf32, #tpu.memory_space<vmem>>, vector<16x128xf32>,
    %68 = arith.truncf %63 : vector<16x128xf32> to vector<16x128xbf16>
    %cst_52 = arith.constant dense<0.000000e+00> : vector<8x128xf32>
    %69 = tpu.matmul %37, %68, %cst_52 {dimension_numbers = #tpu.dot_dimension_numbers<[1], [0], [0], [1], [0, 0, 1, 1], [], []>} : vector<8x16xbf16>, vector<16x128xbf16>, vector<8x128xf32> -> vector<8x128xf32>
    %c0_53 = arith.constant 0 : index
    %c0_54 = arith.constant 0 : index
    %70 = vector.load %arg27[%c0_53, %c0_54] : memref<24x128xf32, #tpu.memory_space<vmem>>, vector<8x128xf32>
    tpu.vector_store %arg27[%c0_53, %c0_54], %69 {strides = array<i32>} : memref<24x128xf32, #tpu.memory_space<vmem>>, vector<8x128xf32>,
    %c8_55 = arith.constant 8 : index
    %c0_56 = arith.constant 0 : index
    %71 = vector.load %arg27[%c8_55, %c0_56] : memref<24x128xf32, #tpu.memory_space<vmem>>, vector<16x128xf32>
    tpu.vector_store %arg27[%c8_55, %c0_56], %63 {strides = array<i32>} : memref<24x128xf32, #tpu.memory_space<vmem>>, vector<16x128xf32>,
    %c0_57 = arith.constant 0 : index
    %c0_58 = arith.constant 0 : index
    %72 = vector.load %arg26[%c0_57, %c0_58] : memref<24x128xf32, #tpu.memory_space<vmem>>, vector<24x128xf32>
    %c0_59 = arith.constant 0 : index
    %c0_60 = arith.constant 0 : index
    %73 = vector.load %arg27[%c0_59, %c0_60] : memref<24x128xf32, #tpu.memory_space<vmem>>, vector<24x128xf32>
    %74 = arith.truncf %72 : vector<24x128xf32> to vector<24x128xbf16>
    %c0_61 = arith.constant 0 : index
    %c0_62 = arith.constant 0 : index
    %75 = vector.load %arg16[%c0_61, %c0_62] : memref<128x128xbf16, #tpu.memory_space<vmem>>, vector<128x128xbf16>
    %cst_63 = arith.constant dense<0.000000e+00> : vector<24x128xf32>
    %76 = tpu.matmul %74, %75, %cst_63 {dimension_numbers = #tpu.dot_dimension_numbers<[1], [0], [0], [1], [0, 0, 1, 1], [], []>} : vector<24x128xbf16>, vector<128x128xbf16>, vector<24x128xf32> -> vector<24x128xf32>
    %c0_64 = arith.constant 0 : index
    %c0_65 = arith.constant 0 : index
    %77 = vector.load %arg17[%c0_64, %c0_65] : memref<1x128xf32, #tpu.memory_space<vmem>>, vector<1x128xf32>
    %78 = vector.broadcast %77 : vector<1x128xf32> to vector<24x128xf32>
    %79 = arith.addf %76, %78 : vector<24x128xf32>
    %80 = math.tanh %79 : vector<24x128xf32>
    %81 = arith.truncf %73 : vector<24x128xf32> to vector<24x128xbf16>
    %c0_66 = arith.constant 0 : index
    %c0_67 = arith.constant 0 : index
    %82 = vector.load %arg16[%c0_66, %c0_67] : memref<128x128xbf16, #tpu.memory_space<vmem>>, vector<128x128xbf16>
    %cst_68 = arith.constant dense<0.000000e+00> : vector<24x128xf32>
    %83 = tpu.matmul %81, %82, %cst_68 {dimension_numbers = #tpu.dot_dimension_numbers<[1], [0], [0], [1], [0, 0, 1, 1], [], []>} : vector<24x128xbf16>, vector<128x128xbf16>, vector<24x128xf32> -> vector<24x128xf32>
    %c0_69 = arith.constant 0 : index
    %c0_70 = arith.constant 0 : index
    %84 = vector.load %arg17[%c0_69, %c0_70] : memref<1x128xf32, #tpu.memory_space<vmem>>, vector<1x128xf32>
    %85 = vector.broadcast %84 : vector<1x128xf32> to vector<24x128xf32>
    %86 = arith.addf %83, %85 : vector<24x128xf32>
    %87 = math.tanh %86 : vector<24x128xf32>
    %c0_71 = arith.constant 0 : index
    %c0_72 = arith.constant 0 : index
    %88 = vector.load %arg18[%c0_71, %c0_72] : memref<1x128xf32, #tpu.memory_space<vmem>>, vector<1x128xf32>
    %89 = vector.broadcast %88 : vector<1x128xf32> to vector<24x128xf32>
    %90 = arith.mulf %80, %89 : vector<24x128xf32>
    %cst_73 = arith.constant dense<0.000000e+00> : vector<24xf32>
    %91 = vector.multi_reduction <add>, %90, %cst_73 [1] : vector<24x128xf32> to vector<24xf32>
    %92 = vector.shape_cast %91 : vector<24xf32> to vector<24x1xf32>
    %c0_74 = arith.constant 0 : index
    %c0_75 = arith.constant 0 : index
    %93 = vector.load %arg18[%c0_74, %c0_75] : memref<1x128xf32, #tpu.memory_space<vmem>>, vector<1x128xf32>
    %94 = vector.broadcast %93 : vector<1x128xf32> to vector<24x128xf32>
    %95 = arith.mulf %87, %94 : vector<24x128xf32>
    %cst_76 = arith.constant dense<0.000000e+00> : vector<24xf32>
    %96 = vector.multi_reduction <add>, %95, %cst_76 [1] : vector<24x128xf32> to vector<24xf32>
    %97 = vector.shape_cast %96 : vector<24xf32> to vector<24x1xf32>
    %98 = arith.subf %92, %97 : vector<24x1xf32>
    %99 = arith.negf %98 : vector<24x1xf32>
    %100 = math.exp %99 : vector<24x1xf32>
    %cst_77 = arith.constant 1.000000e+00 : f32
    %101 = vector.broadcast %cst_77 : f32 to vector<24x1xf32>
    %102 = arith.addf %101, %100 : vector<24x1xf32>
    %103 = arith.divf %101, %102 : vector<24x1xf32>
    %cst_78 = arith.constant 1.000000e+00 : f32
    %104 = vector.broadcast %cst_78 : f32 to vector<24x1xf32>
    %105 = arith.subf %104, %103 : vector<24x1xf32>
    %106 = vector.broadcast %103 : vector<24x1xf32> to vector<24x128xf32>
    %107 = arith.mulf %106, %72 : vector<24x128xf32>
    %108 = vector.broadcast %105 : vector<24x1xf32> to vector<24x128xf32>
    %109 = arith.mulf %108, %73 : vector<24x128xf32>
    %110 = arith.addf %107, %109 : vector<24x128xf32>
    %c0_79 = arith.constant 0 : index
    %c0_80 = arith.constant 0 : index
    %111 = vector.load %arg25[%c0_79, %c0_80] : memref<24x128xf32, #tpu.memory_space<vmem>>, vector<24x128xf32>
    %112 = arith.truncf %111 : vector<24x128xf32> to vector<24x128xbf16>
    %c0_81 = arith.constant 0 : index
    %c0_82 = arith.constant 0 : index
    %113 = vector.load %arg19[%c0_81, %c0_82] : memref<128x128xbf16, #tpu.memory_space<vmem>>, vector<128x128xbf16>
    %cst_83 = arith.constant dense<0.000000e+00> : vector<24x128xf32>
    %114 = tpu.matmul %112, %113, %cst_83 {dimension_numbers = #tpu.dot_dimension_numbers<[1], [0], [0], [1], [0, 0, 1, 1], [], []>} : vector<24x128xbf16>, vector<128x128xbf16>, vector<24x128xf32> -> vector<24x128xf32>
    %c0_84 = arith.constant 0 : index
    %c0_85 = arith.constant 0 : index
    %115 = vector.load %arg20[%c0_84, %c0_85] : memref<1x128xf32, #tpu.memory_space<vmem>>, vector<1x128xf32>
    %116 = vector.broadcast %115 : vector<1x128xf32> to vector<24x128xf32>
    %117 = arith.addf %114, %116 : vector<24x128xf32>
    %118 = arith.negf %117 : vector<24x128xf32>
    %119 = math.exp %118 : vector<24x128xf32>
    %cst_86 = arith.constant 1.000000e+00 : f32
    %120 = vector.broadcast %cst_86 : f32 to vector<24x128xf32>
    %121 = arith.addf %120, %119 : vector<24x128xf32>
    %122 = arith.divf %120, %121 : vector<24x128xf32>
    %123 = arith.truncf %111 : vector<24x128xf32> to vector<24x128xbf16>
    %c0_87 = arith.constant 0 : index
    %c0_88 = arith.constant 0 : index
    %124 = vector.load %arg21[%c0_87, %c0_88] : memref<128x128xbf16, #tpu.memory_space<vmem>>, vector<128x128xbf16>
    %cst_89 = arith.constant dense<0.000000e+00> : vector<24x128xf32>
    %125 = tpu.matmul %123, %124, %cst_89 {dimension_numbers = #tpu.dot_dimension_numbers<[1], [0], [0], [1], [0, 0, 1, 1], [], []>} : vector<24x128xbf16>, vector<128x128xbf16>, vector<24x128xf32> -> vector<24x128xf32>
    %c0_90 = arith.constant 0 : index
    %c0_91 = arith.constant 0 : index
    %126 = vector.load %arg22[%c0_90, %c0_91] : memref<1x128xf32, #tpu.memory_space<vmem>>, vector<1x128xf32>
    %127 = vector.broadcast %126 : vector<1x128xf32> to vector<24x128xf32>
    %128 = arith.addf %125, %127 : vector<24x128xf32>
    %129 = arith.negf %128 : vector<24x128xf32>
    %130 = math.exp %129 : vector<24x128xf32>
    %cst_92 = arith.constant 1.000000e+00 : f32
    %131 = vector.broadcast %cst_92 : f32 to vector<24x128xf32>
    %132 = arith.addf %131, %130 : vector<24x128xf32>
    %133 = arith.divf %131, %132 : vector<24x128xf32>
    %134 = arith.subf %72, %110 : vector<24x128xf32>
    %135 = arith.mulf %122, %134 : vector<24x128xf32>
    %136 = arith.subf %73, %110 : vector<24x128xf32>
    %137 = arith.mulf %133, %136 : vector<24x128xf32>
    %138 = arith.addf %135, %137 : vector<24x128xf32>
    %139 = arith.addf %138, %110 : vector<24x128xf32>
    %cst_93 = arith.constant 3.000000e+00 : f32
    %140 = vector.broadcast %cst_93 : f32 to vector<24x128xf32>
    %141 = arith.divf %139, %140 : vector<24x128xf32>
    %c0_94 = arith.constant 0 : index
    %c0_95 = arith.constant 0 : index
    %142 = vector.load %arg24[%c0_94, %c0_95] : memref<24x128xf32, #tpu.memory_space<vmem>>, vector<24x128xf32>
    tpu.vector_store %arg24[%c0_94, %c0_95], %141 {strides = array<i32>} : memref<24x128xf32, #tpu.memory_space<vmem>>, vector<24x128xf32>,
    %143 = arith.addf %111, %141 : vector<24x128xf32>
    %c0_96 = arith.constant 0 : index
    %c0_97 = arith.constant 0 : index
    %144 = vector.load %arg23[%c0_96, %c0_97] : memref<24x128xf32, #tpu.memory_space<vmem>>, vector<24x128xf32>
    tpu.vector_store %arg23[%c0_96, %c0_97], %143 {strides = array<i32>} : memref<24x128xf32, #tpu.memory_space<vmem>>, vector<24x128xf32>,
    return
  }
}

</mosaic_0001>

<llo_original>
// kernel: tpu_custom_call.1
$region0: #{tpu_custom_call.1}
  #allocation0 [shape = 'u32[]', space=smem, size = 0x4, offset = 0x4, fixed_abs, tag = 'smem constant byte address 0x4 - core index']
  #allocation1 [shape = 'u32[144,128]{1,0:T(1,128)}', space=vmem, size = 0x12000, scoped, tag = 'internal scratch']
  #allocation2 [shape = 'f32[24,128]{1,0:T(8,128)}', space=vmem, size = 0x3000, scoped, tag = 'scratch operand']
  #allocation3 [shape = 'f32[24,128]{1,0:T(8,128)}', space=vmem, size = 0x3000, scoped, tag = 'scratch operand']
  %s0 = inlined_call_operand.vmem [shape: bf16[16,128], index: 0, kind: input, shape index: {}]
  %s1 = inlined_call_operand.hbm [shape: bf16[16,128], index: 1, kind: input, shape index: {}]
  %s2 = inlined_call_operand.hbm [shape: bf16[128,128], index: 2, kind: input, shape index: {}]
  %s3 = inlined_call_operand.hbm [shape: f32[1,128], index: 3, kind: input, shape index: {}]
  %s4 = inlined_call_operand.hbm [shape: bf16[128,128], index: 4, kind: input, shape index: {}]
  %s5 = inlined_call_operand.hbm [shape: f32[1,128], index: 5, kind: input, shape index: {}]
  %s6 = inlined_call_operand.hbm [shape: f32[8,128], index: 6, kind: input, shape index: {}]
  %s7 = inlined_call_operand.vmem [shape: f32[16,128], index: 7, kind: input, shape index: {}]
  %s8 = inlined_call_operand.hbm [shape: bf16[128,128], index: 8, kind: input, shape index: {}]
  %s9 = inlined_call_operand.hbm [shape: f32[1,128], index: 9, kind: input, shape index: {}]
  %s10 = inlined_call_operand.hbm [shape: bf16[128,128], index: 10, kind: input, shape index: {}]
  %s11 = inlined_call_operand.hbm [shape: f32[1,128], index: 11, kind: input, shape index: {}]
  %s12 = inlined_call_operand.hbm [shape: bf16[8,16], index: 12, kind: input, shape index: {}]
  %s13 = inlined_call_operand.vmem [shape: bf16[16,8], index: 13, kind: input, shape index: {}]
  %s14 = inlined_call_operand.vmem [shape: bf16[16,16], index: 14, kind: input, shape index: {}]
  %s15 = inlined_call_operand.hbm [shape: bf16[16,16], index: 15, kind: input, shape index: {}]
  %s16 = inlined_call_operand.hbm [shape: bf16[128,128], index: 16, kind: input, shape index: {}]
  %s17 = inlined_call_operand.vmem [shape: f32[1,128], index: 17, kind: input, shape index: {}]
  %s18 = inlined_call_operand.vmem [shape: f32[1,128], index: 18, kind: input, shape index: {}]
  %s19 = inlined_call_operand.hbm [shape: bf16[128,128], index: 19, kind: input, shape index: {}]
  %s20 = inlined_call_operand.vmem [shape: f32[1,128], index: 20, kind: input, shape index: {}]
  %s21 = inlined_call_operand.hbm [shape: bf16[128,128], index: 21, kind: input, shape index: {}]
  %s22 = inlined_call_operand.vmem [shape: f32[1,128], index: 22, kind: input, shape index: {}]
  %s23 = inlined_call_operand.hbm [shape: f32[24,128], index: 23, kind: output, shape index: {0}]
  %s24 = inlined_call_operand.hbm [shape: f32[24,128], index: 24, kind: output, shape index: {1}]
  %s25 = inlined_call_operand.hbm [shape: f32[24,128], index: 25, kind: output, shape index: {2}]
  %26 = xla_tuple %s23, %s24, %s25
  %s27 = sld [smem:[#allocation0]]
  $region178: #{tpu_custom_call.1} parent=0
    _
  %s29 = ssub.s32 1, %s27
  %s30 = scalar_select 0, %s29, %s27
  $region1: #{tpu_custom_call.1} parent=0
    #allocation4 [shape = 'u8[4096]{0}', space=vmem, size = 0x1000, scoped, tag = 'input window, operand 1, single buffered']
    #allocation5 [shape = 's32[1]{0}', space=sflag, size = 0x4, scoped, tag = 'scoped memory for tpu_custom_call.1']
    #allocation6 [shape = 's32[1]{0}', space=sflag, size = 0x4, scoped, tag = 'scoped memory for tpu_custom_call.1']
    #allocation7 [shape = 'u8[32768]{0}', space=vmem, size = 0x8000, scoped, tag = 'input window, operand 2, single buffered']
    #allocation8 [shape = 's32[1]{0}', space=sflag, size = 0x4, scoped, tag = 'scoped memory for tpu_custom_call.1']
    #allocation9 [shape = 'u8[512]{0}', space=vmem, size = 0x400, scoped, tag = 'input window, operand 3, single buffered']
    #allocation10 [shape = 'u8[32768]{0}', space=vmem, size = 0x8000, scoped, tag = 'input window, operand 4, single buffered']
    #allocation11 [shape = 's32[1]{0}', space=sflag, size = 0x4, scoped, tag = 'scoped memory for tpu_custom_call.1']
    #allocation12 [shape = 'u8[512]{0}', space=vmem, size = 0x400, scoped, tag = 'input window, operand 5, single buffered']
    #allocation13 [shape = 'u8[4096]{0}', space=vmem, size = 0x1000, scoped, tag = 'input window, operand 6, single buffered']
    #allocation14 [shape = 's32[1]{0}', space=sflag, size = 0x4, scoped, tag = 'scoped memory for tpu_custom_call.1']
    #allocation15 [shape = 'u8[32768]{0}', space=vmem, size = 0x8000, scoped, tag = 'input window, operand 8, single buffered']
    #allocation16 [shape = 'u8[512]{0}', space=vmem, size = 0x400, scoped, tag = 'input window, operand 9, single buffered']
    #allocation17 [shape = 's32[1]{0}', space=sflag, size = 0x4, scoped, tag = 'scoped memory for tpu_custom_call.1']
    #allocation18 [shape = 'u8[32768]{0}', space=vmem, size = 0x8000, scoped, tag = 'input window, operand 10, single buffered']
    #allocation19 [shape = 'u8[512]{0}', space=vmem, size = 0x400, scoped, tag = 'input window, operand 11, single buffered']
    #allocation20 [shape = 's32[1]{0}', space=sflag, size = 0x4, scoped, tag = 'scoped memory for tpu_custom_call.1']
    #allocation21 [shape = 'u8[2048]{0}', space=vmem, size = 0x800, scoped, tag = 'input window, operand 12, single buffered']
    #allocation22 [shape = 'u8[4096]{0}', space=vmem, size = 0x1000, scoped, tag = 'input window, operand 15, single buffered']
    #allocation23 [shape = 's32[1]{0}', space=sflag, size = 0x4, scoped, tag = 'scoped memory for tpu_custom_call.1']
    #allocation24 [shape = 'u8[32768]{0}', space=vmem, size = 0x8000, scoped, tag = 'input window, operand 16, single buffered']
    #allocation25 [shape = 'u8[32768]{0}', space=vmem, size = 0x8000, scoped, tag = 'input window, operand 19, single buffered']
    #allocation26 [shape = 's32[1]{0}', space=sflag, size = 0x4, scoped, tag = 'scoped memory for tpu_custom_call.1']
    #allocation27 [shape = 'u8[32768]{0}', space=vmem, size = 0x8000, scoped, tag = 'input window, operand 21, single buffered']
    #allocation28 [shape = 'u8[12288]{0}', space=vmem, size = 0x3000, scoped, tag = 'output window, operand 0, single buffered']
    #allocation29 [shape = 'u8[12288]{0}', space=vmem, size = 0x3000, scoped, tag = 'output window, operand 1, single buffered']
    #allocation30 [shape = 's32[1]{0}', space=sflag, size = 0x4, scoped, tag = 'scoped memory for tpu_custom_call.1']
    #allocation31 [shape = 'u8[12288]{0}', space=vmem, size = 0x3000, scoped, tag = 'output window, operand 2, single buffered']
    %31 = vsyncpa [#allocation5], 0
    %32 = vsyncpa [#allocation8], 0
    %33 = vsyncpa [#allocation11], 0
    %34 = vsyncpa [#allocation14], 0
    %35 = vsyncpa [#allocation17], 0
    %36 = vsyncpa [#allocation20], 0
    %37 = vsyncpa [#allocation23], 0
    %38 = vsyncpa [#allocation26], 0
    %39 = vsyncpa [#allocation6], 0
    %40 = vsyncpa [#allocation30], 0
    // Predicated region
    $region2: #{tpu_custom_call.1} parent=1 // pred_check
      _
    $region3: #{tpu_custom_call.1} parent=1 // pred_check_branch
      %42 = sbr.rel (0) target = $region5
    $region4: #{tpu_custom_call.1} parent=1 // pred_region
      _
    $region5: #{tpu_custom_call.1} parent=1 // pred_fallthru
      _
    // Predicated region
    $region6: #{tpu_custom_call.1} parent=1 // pred_check
      _
    $region7: #{tpu_custom_call.1} parent=1 // pred_check_branch
      %44 = sbr.rel (0) target = $region9
    $region8: #{tpu_custom_call.1} parent=1 // pred_region
      %s46 = ssub.s32 128, 128
      %47 = vsyncadd [#allocation5], %s46
      %s48 = sshll.u32 [#allocation4], 4
      %s49 = int_to_ptr.vmem [resolvable:$true] %s48
      %54 = dma.hbm_to_vmem [thread:$0]  %s1, 128, %s49, [#allocation5], 64, 64, 4
    $region9: #{tpu_custom_call.1} parent=1 // pred_fallthru
      _
    // Predicated region
    $region10: #{tpu_custom_call.1} parent=1 // pred_check
      _
    $region11: #{tpu_custom_call.1} parent=1 // pred_check_branch
      %56 = sbr.rel (0) target = $region13
    $region12: #{tpu_custom_call.1} parent=1 // pred_region
      %s58 = ssub.s32 1024, 1024
      %59 = vsyncadd [#allocation8], %s58
      %s60 = sshll.u32 [#allocation7], 4
      %s61 = int_to_ptr.vmem [resolvable:$true] %s60
      %66 = dma.hbm_to_vmem [thread:$0]  %s2, 1024, %s61, [#allocation8], 64, 64, 4
    $region13: #{tpu_custom_call.1} parent=1 // pred_fallthru
      _
    // Predicated region
    $region14: #{tpu_custom_call.1} parent=1 // pred_check
      _
    $region15: #{tpu_custom_call.1} parent=1 // pred_check_branch
      %68 = sbr.rel (0) target = $region17
    $region16: #{tpu_custom_call.1} parent=1 // pred_region
      %s70 = ssub.s32 16, 16
      %71 = vsyncadd [#allocation8], %s70
      %s73 = sshll.u32 [#allocation9], 4
      %s74 = int_to_ptr.vmem [resolvable:$true] %s73
      %76 = dma.hbm_to_vmem [thread:$0]  %s3, 16, %s74, [#allocation8]
    $region17: #{tpu_custom_call.1} parent=1 // pred_fallthru
      _
    // Predicated region
    $region18: #{tpu_custom_call.1} parent=1 // pred_check
      _
    $region19: #{tpu_custom_call.1} parent=1 // pred_check_branch
      %78 = sbr.rel (0) target = $region21
    $region20: #{tpu_custom_call.1} parent=1 // pred_region
      %s80 = ssub.s32 1024, 1024
      %81 = vsyncadd [#allocation11], %s80
      %s82 = sshll.u32 [#allocation10], 4
      %s83 = int_to_ptr.vmem [resolvable:$true] %s82
      %88 = dma.hbm_to_vmem [thread:$0]  %s4, 1024, %s83, [#allocation11], 64, 64, 4
    $region21: #{tpu_custom_call.1} parent=1 // pred_fallthru
      _
    // Predicated region
    $region22: #{tpu_custom_call.1} parent=1 // pred_check
      _
    $region23: #{tpu_custom_call.1} parent=1 // pred_check_branch
      %90 = sbr.rel (0) target = $region25
    $region24: #{tpu_custom_call.1} parent=1 // pred_region
      %s92 = ssub.s32 16, 16
      %93 = vsyncadd [#allocation11], %s92
      %s95 = sshll.u32 [#allocation12], 4
      %s96 = int_to_ptr.vmem [resolvable:$true] %s95
      %98 = dma.hbm_to_vmem [thread:$0]  %s5, 16, %s96, [#allocation11]
    $region25: #{tpu_custom_call.1} parent=1 // pred_fallthru
      _
    // Predicated region
    $region26: #{tpu_custom_call.1} parent=1 // pred_check
      _
    $region27: #{tpu_custom_call.1} parent=1 // pred_check_branch
      %100 = sbr.rel (0) target = $region29
    $region28: #{tpu_custom_call.1} parent=1 // pred_region
      %s102 = ssub.s32 128, 128
      %103 = vsyncadd [#allocation14], %s102
      %s105 = sshll.u32 [#allocation13], 4
      %s106 = int_to_ptr.vmem [resolvable:$true] %s105
      %108 = dma.hbm_to_vmem [thread:$0]  %s6, 128, %s106, [#allocation14]
    $region29: #{tpu_custom_call.1} parent=1 // pred_fallthru
      _
    // Predicated region
    $region30: #{tpu_custom_call.1} parent=1 // pred_check
      _
    $region31: #{tpu_custom_call.1} parent=1 // pred_check_branch
      %110 = sbr.rel (0) target = $region33
    $region32: #{tpu_custom_call.1} parent=1 // pred_region
      _
    $region33: #{tpu_custom_call.1} parent=1 // pred_fallthru
      _
    // Predicated region
    $region34: #{tpu_custom_call.1} parent=1 // pred_check
      _
    $region35: #{tpu_custom_call.1} parent=1 // pred_check_branch
      %112 = sbr.rel (0) target = $region37
    $region36: #{tpu_custom_call.1} parent=1 // pred_region
      %s114 = ssub.s32 1024, 1024
      %115 = vsyncadd [#allocation14], %s114
      %s116 = sshll.u32 [#allocation15], 4
      %s117 = int_to_ptr.vmem [resolvable:$true] %s116
      %122 = dma.hbm_to_vmem [thread:$0]  %s8, 1024, %s117, [#allocation14], 64, 64, 4
    $region37: #{tpu_custom_call.1} parent=1 // pred_fallthru
      _
    // Predicated region
    $region38: #{tpu_custom_call.1} parent=1 // pred_check
      _
    $region39: #{tpu_custom_call.1} parent=1 // pred_check_branch
      %124 = sbr.rel (0) target = $region41
    $region40: #{tpu_custom_call.1} parent=1 // pred_region
      %s126 = ssub.s32 16, 16
      %127 = vsyncadd [#allocation17], %s126
      %s129 = sshll.u32 [#allocation16], 4
      %s130 = int_to_ptr.vmem [resolvable:$true] %s129
      %132 = dma.hbm_to_vmem [thread:$0]  %s9, 16, %s130, [#allocation17]
    $region41: #{tpu_custom_call.1} parent=1 // pred_fallthru
      _
    // Predicated region
    $region42: #{tpu_custom_call.1} parent=1 // pred_check
      _
    $region43: #{tpu_custom_call.1} parent=1 // pred_check_branch
      %134 = sbr.rel (0) target = $region45
    $region44: #{tpu_custom_call.1} parent=1 // pred_region
      %s136 = ssub.s32 1024, 1024
      %137 = vsyncadd [#allocation17], %s136
      %s138 = sshll.u32 [#allocation18], 4
      %s139 = int_to_ptr.vmem [resolvable:$true] %s138
      %144 = dma.hbm_to_vmem [thread:$0]  %s10, 1024, %s139, [#allocation17], 64, 64, 4
    $region45: #{tpu_custom_call.1} parent=1 // pred_fallthru
      _
    // Predicated region
    $region46: #{tpu_custom_call.1} parent=1 // pred_check
      _
    $region47: #{tpu_custom_call.1} parent=1 // pred_check_branch
      %146 = sbr.rel (0) target = $region49
    $region48: #{tpu_custom_call.1} parent=1 // pred_region
      %s148 = ssub.s32 16, 16
      %149 = vsyncadd [#allocation20], %s148
      %s151 = sshll.u32 [#allocation19], 4
      %s152 = int_to_ptr.vmem [resolvable:$true] %s151
      %154 = dma.hbm_to_vmem [thread:$0]  %s11, 16, %s152, [#allocation20]
    $region49: #{tpu_custom_call.1} parent=1 // pred_fallthru
      _
    // Predicated region
    $region50: #{tpu_custom_call.1} parent=1 // pred_check
      _
    $region51: #{tpu_custom_call.1} parent=1 // pred_check_branch
      %156 = sbr.rel (0) target = $region53
    $region52: #{tpu_custom_call.1} parent=1 // pred_region
      %s158 = ssub.s32 64, 64
      %159 = vsyncadd [#allocation20], %s158
      %s161 = sshll.u32 [#allocation21], 4
      %s162 = int_to_ptr.vmem [resolvable:$true] %s161
      %164 = dma.hbm_to_vmem [thread:$0]  %s12, 64, %s162, [#allocation20]
    $region53: #{tpu_custom_call.1} parent=1 // pred_fallthru
      _
    // Predicated region
    $region54: #{tpu_custom_call.1} parent=1 // pred_check
      _
    $region55: #{tpu_custom_call.1} parent=1 // pred_check_branch
      %166 = sbr.rel (0) target = $region57
    $region56: #{tpu_custom_call.1} parent=1 // pred_region
      _
    $region57: #{tpu_custom_call.1} parent=1 // pred_fallthru
      _
    // Predicated region
    $region58: #{tpu_custom_call.1} parent=1 // pred_check
      _
    $region59: #{tpu_custom_call.1} parent=1 // pred_check_branch
      %168 = sbr.rel (0) target = $region61
    $region60: #{tpu_custom_call.1} parent=1 // pred_region
      _
    $region61: #{tpu_custom_call.1} parent=1 // pred_fallthru
      _
    // Predicated region
    $region62: #{tpu_custom_call.1} parent=1 // pred_check
      _
    $region63: #{tpu_custom_call.1} parent=1 // pred_check_branch
      %170 = sbr.rel (0) target = $region65
    $region64: #{tpu_custom_call.1} parent=1 // pred_region
      %s172 = ssub.s32 128, 128
      %173 = vsyncadd [#allocation23], %s172
      %s174 = sshll.u32 [#allocation22], 4
      %s175 = int_to_ptr.vmem [resolvable:$true] %s174
      %180 = dma.hbm_to_vmem [thread:$0]  %s15, 128, %s175, [#allocation23], 64, 64, 4
    $region65: #{tpu_custom_call.1} parent=1 // pred_fallthru
      _
    // Predicated region
    $region66: #{tpu_custom_call.1} parent=1 // pred_check
      _
    $region67: #{tpu_custom_call.1} parent=1 // pred_check_branch
      %182 = sbr.rel (0) target = $region69
    $region68: #{tpu_custom_call.1} parent=1 // pred_region
      %s184 = ssub.s32 1024, 1024
      %185 = vsyncadd [#allocation23], %s184
      %s186 = sshll.u32 [#allocation24], 4
      %s187 = int_to_ptr.vmem [resolvable:$true] %s186
      %192 = dma.hbm_to_vmem [thread:$0]  %s16, 1024, %s187, [#allocation23], 64, 64, 4
    $region69: #{tpu_custom_call.1} parent=1 // pred_fallthru
      _
    // Predicated region
    $region70: #{tpu_custom_call.1} parent=1 // pred_check
      _
    $region71: #{tpu_custom_call.1} parent=1 // pred_check_branch
      %194 = sbr.rel (0) target = $region73
    $region72: #{tpu_custom_call.1} parent=1 // pred_region
      _
    $region73: #{tpu_custom_call.1} parent=1 // pred_fallthru
      _
    // Predicated region
    $region74: #{tpu_custom_call.1} parent=1 // pred_check
      _
    $region75: #{tpu_custom_call.1} parent=1 // pred_check_branch
      %196 = sbr.rel (0) target = $region77
    $region76: #{tpu_custom_call.1} parent=1 // pred_region
      _
    $region77: #{tpu_custom_call.1} parent=1 // pred_fallthru
      _
    // Predicated region
    $region78: #{tpu_custom_call.1} parent=1 // pred_check
      _
    $region79: #{tpu_custom_call.1} parent=1 // pred_check_branch
      %198 = sbr.rel (0) target = $region81
    $region80: #{tpu_custom_call.1} parent=1 // pred_region
      %s200 = ssub.s32 1024, 1024
      %201 = vsyncadd [#allocation26], %s200
      %s202 = sshll.u32 [#allocation25], 4
      %s203 = int_to_ptr.vmem [resolvable:$true] %s202
      %208 = dma.hbm_to_vmem [thread:$0]  %s19, 1024, %s203, [#allocation26], 64, 64, 4
    $region81: #{tpu_custom_call.1} parent=1 // pred_fallthru
      _
    // Predicated region
    $region82: #{tpu_custom_call.1} parent=1 // pred_check
      _
    $region83: #{tpu_custom_call.1} parent=1 // pred_check_branch
      %210 = sbr.rel (0) target = $region85
    $region84: #{tpu_custom_call.1} parent=1 // pred_region
      _
    $region85: #{tpu_custom_call.1} parent=1 // pred_fallthru
      _
    // Predicated region
    $region86: #{tpu_custom_call.1} parent=1 // pred_check
      _
    $region87: #{tpu_custom_call.1} parent=1 // pred_check_branch
      %212 = sbr.rel (0) target = $region89
    $region88: #{tpu_custom_call.1} parent=1 // pred_region
      %s214 = ssub.s32 1024, 1024
      %215 = vsyncadd [#allocation26], %s214
      %s216 = sshll.u32 [#allocation27], 4
      %s217 = int_to_ptr.vmem [resolvable:$true] %s216
      %222 = dma.hbm_to_vmem [thread:$0]  %s21, 1024, %s217, [#allocation26], 64, 64, 4
    $region89: #{tpu_custom_call.1} parent=1 // pred_fallthru
      _
    // Predicated region
    $region90: #{tpu_custom_call.1} parent=1 // pred_check
      _
    $region91: #{tpu_custom_call.1} parent=1 // pred_check_branch
      %224 = sbr.rel (0) target = $region93
    $region92: #{tpu_custom_call.1} parent=1 // pred_region
      _
    $region93: #{tpu_custom_call.1} parent=1 // pred_fallthru
      _
    // Predicated region
    $region94: #{tpu_custom_call.1} parent=1 // pred_check
      _
    $region95: #{tpu_custom_call.1} parent=1 // pred_check_branch
      %226 = sbr.rel (0) target = $region97
    $region96: #{tpu_custom_call.1} parent=1 // pred_region
      %227 = dma.done [#allocation5], 128
    $region97: #{tpu_custom_call.1} parent=1 // pred_fallthru
      _
    // Predicated region
    $region98: #{tpu_custom_call.1} parent=1 // pred_check
      _
    $region99: #{tpu_custom_call.1} parent=1 // pred_check_branch
      %229 = sbr.rel (0) target = $region101
    $region100: #{tpu_custom_call.1} parent=1 // pred_region
      %230 = dma.done [#allocation8], 1024
    $region101: #{tpu_custom_call.1} parent=1 // pred_fallthru
      _
    // Predicated region
    $region102: #{tpu_custom_call.1} parent=1 // pred_check
      _
    $region103: #{tpu_custom_call.1} parent=1 // pred_check_branch
      %232 = sbr.rel (0) target = $region105
    $region104: #{tpu_custom_call.1} parent=1 // pred_region
      %233 = dma.done [#allocation8], 16
    $region105: #{tpu_custom_call.1} parent=1 // pred_fallthru
      _
    // Predicated region
    $region106: #{tpu_custom_call.1} parent=1 // pred_check
      _
    $region107: #{tpu_custom_call.1} parent=1 // pred_check_branch
      %235 = sbr.rel (0) target = $region109
    $region108: #{tpu_custom_call.1} parent=1 // pred_region
      %236 = dma.done [#allocation11], 1024
    $region109: #{tpu_custom_call.1} parent=1 // pred_fallthru
      _
    // Predicated region
    $region110: #{tpu_custom_call.1} parent=1 // pred_check
      _
    $region111: #{tpu_custom_call.1} parent=1 // pred_check_branch
      %238 = sbr.rel (0) target = $region113
    $region112: #{tpu_custom_call.1} parent=1 // pred_region
      %239 = dma.done [#allocation11], 16
    $region113: #{tpu_custom_call.1} parent=1 // pred_fallthru
      _
    // Predicated region
    $region114: #{tpu_custom_call.1} parent=1 // pred_check
      _
    $region115: #{tpu_custom_call.1} parent=1 // pred_check_branch
      %241 = sbr.rel (0) target = $region117
    $region116: #{tpu_custom_call.1} parent=1 // pred_region
      %242 = dma.done [#allocation14], 128
    $region117: #{tpu_custom_call.1} parent=1 // pred_fallthru
      _
    // Predicated region
    $region118: #{tpu_custom_call.1} parent=1 // pred_check
      _
    $region119: #{tpu_custom_call.1} parent=1 // pred_check_branch
      %244 = sbr.rel (0) target = $region121
    $region120: #{tpu_custom_call.1} parent=1 // pred_region
      %245 = dma.done [#allocation14], 1024
    $region121: #{tpu_custom_call.1} parent=1 // pred_fallthru
      _
    // Predicated region
    $region122: #{tpu_custom_call.1} parent=1 // pred_check
      _
    $region123: #{tpu_custom_call.1} parent=1 // pred_check_branch
      %247 = sbr.rel (0) target = $region125
    $region124: #{tpu_custom_call.1} parent=1 // pred_region
      %248 = dma.done [#allocation17], 16
    $region125: #{tpu_custom_call.1} parent=1 // pred_fallthru
      _
    // Predicated region
    $region126: #{tpu_custom_call.1} parent=1 // pred_check
      _
    $region127: #{tpu_custom_call.1} parent=1 // pred_check_branch
      %250 = sbr.rel (0) target = $region129
    $region128: #{tpu_custom_call.1} parent=1 // pred_region
      %251 = dma.done [#allocation17], 1024
    $region129: #{tpu_custom_call.1} parent=1 // pred_fallthru
      _
    // Predicated region
    $region130: #{tpu_custom_call.1} parent=1 // pred_check
      _
    $region131: #{tpu_custom_call.1} parent=1 // pred_check_branch
      %253 = sbr.rel (0) target = $region133
    $region132: #{tpu_custom_call.1} parent=1 // pred_region
      %254 = dma.done [#allocation20], 16
    $region133: #{tpu_custom_call.1} parent=1 // pred_fallthru
      _
    // Predicated region
    $region134: #{tpu_custom_call.1} parent=1 // pred_check
      _
    $region135: #{tpu_custom_call.1} parent=1 // pred_check_branch
      %256 = sbr.rel (0) target = $region137
    $region136: #{tpu_custom_call.1} parent=1 // pred_region
      %257 = dma.done [#allocation20], 64
    $region137: #{tpu_custom_call.1} parent=1 // pred_fallthru
      _
    // Predicated region
    $region138: #{tpu_custom_call.1} parent=1 // pred_check
      _
    $region139: #{tpu_custom_call.1} parent=1 // pred_check_branch
      %259 = sbr.rel (0) target = $region141
    $region140: #{tpu_custom_call.1} parent=1 // pred_region
      %260 = dma.done [#allocation23], 128
    $region141: #{tpu_custom_call.1} parent=1 // pred_fallthru
      _
    // Predicated region
    $region142: #{tpu_custom_call.1} parent=1 // pred_check
      _
    $region143: #{tpu_custom_call.1} parent=1 // pred_check_branch
      %262 = sbr.rel (0) target = $region145
    $region144: #{tpu_custom_call.1} parent=1 // pred_region
      %263 = dma.done [#allocation23], 1024
    $region145: #{tpu_custom_call.1} parent=1 // pred_fallthru
      _
    // Predicated region
    $region146: #{tpu_custom_call.1} parent=1 // pred_check
      _
    $region147: #{tpu_custom_call.1} parent=1 // pred_check_branch
      %265 = sbr.rel (0) target = $region149
    $region148: #{tpu_custom_call.1} parent=1 // pred_region
      %266 = dma.done [#allocation26], 1024
    $region149: #{tpu_custom_call.1} parent=1 // pred_fallthru
      _
    // Predicated region
    $region150: #{tpu_custom_call.1} parent=1 // pred_check
      _
    $region151: #{tpu_custom_call.1} parent=1 // pred_check_branch
      %268 = sbr.rel (0) target = $region153
    $region152: #{tpu_custom_call.1} parent=1 // pred_region
      %269 = dma.done [#allocation26], 1024
    $region153: #{tpu_custom_call.1} parent=1 // pred_fallthru
      _
    %v271 = vld [vmem:[%s0] sm:$0xf]
    %v272 = vld [vmem:[%s0 + $0x4] sm:$0xf]
    %v273 = vld [vmem:[#allocation7] sm:$0xf]
    %v274 = vld [vmem:[#allocation7 + $0x4] sm:$0xf]
    %v275 = vld [vmem:[#allocation7 + $0x8] sm:$0xf]
    %v276 = vld [vmem:[#allocation7 + $0xc] sm:$0xf]
    %v277 = vld [vmem:[#allocation7 + $0x10] sm:$0xf]
    %v278 = vld [vmem:[#allocation7 + $0x14] sm:$0xf]
    %v279 = vld [vmem:[#allocation7 + $0x18] sm:$0xf]
    %v280 = vld [vmem:[#allocation7 + $0x1c] sm:$0xf]
    %v281 = vld [vmem:[#allocation7 + $0x20] sm:$0xf]
    %v282 = vld [vmem:[#allocation7 + $0x24] sm:$0xf]
    %v283 = vld [vmem:[#allocation7 + $0x28] sm:$0xf]
    %v284 = vld [vmem:[#allocation7 + $0x2c] sm:$0xf]
    %v285 = vld [vmem:[#allocation7 + $0x30] sm:$0xf]
    %v286 = vld [vmem:[#allocation7 + $0x34] sm:$0xf]
    %v287 = vld [vmem:[#allocation7 + $0x38] sm:$0xf]
    %v288 = vld [vmem:[#allocation7 + $0x3c] sm:$0xf]
    %v289 = vld [vmem:[#allocation9] sm:$0x1]
    %v291 = vlaneseq
    %v292 = vshrl.u32 %v291, 7
    %v293 = vsub.s32 0, %v292
    %v294 = vrot.slane %v289, %v293
    %v298 = vunpack.c.l.b16 %v271
    %v299 = vunpack.c.l.b16 %v272
    %v300 = vpack.c.b16 %v299, %v298
    %v318 = vunpack.c.l.b16 %v273
    %v319 = vunpack.c.l.b16 %v274
    %v320 = vunpack.c.l.b16 %v275
    %v321 = vunpack.c.l.b16 %v276
    %v322 = vunpack.c.l.b16 %v277
    %v323 = vunpack.c.l.b16 %v278
    %v324 = vunpack.c.l.b16 %v279
    %v325 = vunpack.c.l.b16 %v280
    %v326 = vunpack.c.l.b16 %v281
    %v327 = vunpack.c.l.b16 %v282
    %v328 = vunpack.c.l.b16 %v283
    %v329 = vunpack.c.l.b16 %v284
    %v330 = vunpack.c.l.b16 %v285
    %v331 = vunpack.c.l.b16 %v286
    %v332 = vunpack.c.l.b16 %v287
    %v333 = vunpack.c.l.b16 %v288
    %v334 = vpack.c.b16 %v319, %v318
    %v335 = vpack.c.b16 %v321, %v320
    %v336 = vpack.c.b16 %v323, %v322
    %v337 = vpack.c.b16 %v325, %v324
    %v338 = vpack.c.b16 %v327, %v326
    %v339 = vpack.c.b16 %v329, %v328
    %v340 = vpack.c.b16 %v331, %v330
    %v341 = vpack.c.b16 %v333, %v332
    %350 = vmatprep.subr.bf16.mxu0 0
    %351 = vmatpush1.bf16.msra.mxu0 %v341
    %352 = vmatprep.subr.bf16.mxu0 0
    %353 = vmatpush1.bf16.msra.mxu0 %v340
    %354 = vmatprep.subr.bf16.mxu0 0
    %355 = vmatpush1.bf16.msra.mxu0 %v339
    %356 = vmatprep.subr.bf16.mxu0 0
    %357 = vmatpush1.bf16.msra.mxu0 %v338
    %358 = vmatprep.subr.bf16.mxu0 0
    %359 = vmatpush1.bf16.msra.mxu0 %v337
    %360 = vmatprep.subr.bf16.mxu0 0
    %361 = vmatpush1.bf16.msra.mxu0 %v336
    %362 = vmatprep.subr.bf16.mxu0 0
    %363 = vmatpush1.bf16.msra.mxu0 %v335
    %364 = vmatprep.subr.bf16.mxu0 0
    %365 = vmatpush1.bf16.msra.mxu0 %v334
    %366 = vmatprep.subr.bf16.mxu0 0
    %367 = vmatpush2.bf16.msra.mxu0 0
    %368 = vmatprep.subr.bf16.mxu0 0
    %369 = vmatpush2.bf16.msra.mxu0 0
    %370 = vmatprep.subr.bf16.mxu0 0
    %371 = vmatpush2.bf16.msra.mxu0 0
    %372 = vmatprep.subr.bf16.mxu0 0
    %373 = vmatpush2.bf16.msra.mxu0 0
    %374 = vmatprep.subr.bf16.mxu0 0
    %375 = vmatpush2.bf16.msra.mxu0 0
    %376 = vmatprep.subr.bf16.mxu0 0
    %377 = vmatpush2.bf16.msra.mxu0 0
    %378 = vmatprep.subr.bf16.mxu0 0
    %379 = vmatpush2.bf16.msra.mxu0 0
    %380 = vmatprep.subr.bf16.mxu0 0
    %381 = vmatpush2.bf16.msra.mxu0 0
    %382 = vmatprep.mubr.bf16.mxu0 0
    %383 = vmatmul.mubr.bf16.gmra.mxu0 %v300
    %v384 = vpop.f32.mrf.mxu0
    %v385 = vadd.f32 %v294, %v384
    %v386 = vpop.f32.mrf.mxu0
    %v387 = vpop.f32.mrf.mxu0
    %v388 = vadd.f32 %v294, %v387
    %v389 = vpop.f32.mrf.mxu0
    %390 = vdwg.mxu0
    %v391 = vld [vmem:[#allocation4] sm:$0xf]
    %v392 = vld [vmem:[#allocation4 + $0x4] sm:$0xf]
    %v393 = vld [vmem:[#allocation10] sm:$0xf]
    %v394 = vld [vmem:[#allocation10 + $0x4] sm:$0xf]
    %v395 = vld [vmem:[#allocation10 + $0x8] sm:$0xf]
    %v396 = vld [vmem:[#allocation10 + $0xc] sm:$0xf]
    %v397 = vld [vmem:[#allocation10 + $0x10] sm:$0xf]
    %v398 = vld [vmem:[#allocation10 + $0x14] sm:$0xf]
    %v399 = vld [vmem:[#allocation10 + $0x18] sm:$0xf]
    %v400 = vld [vmem:[#allocation10 + $0x1c] sm:$0xf]
    %v401 = vld [vmem:[#allocation10 + $0x20] sm:$0xf]
    %v402 = vld [vmem:[#allocation10 + $0x24] sm:$0xf]
    %v403 = vld [vmem:[#allocation10 + $0x28] sm:$0xf]
    %v404 = vld [vmem:[#allocation10 + $0x2c] sm:$0xf]
    %v405 = vld [vmem:[#allocation10 + $0x30] sm:$0xf]
    %v406 = vld [vmem:[#allocation10 + $0x34] sm:$0xf]
    %v407 = vld [vmem:[#allocation10 + $0x38] sm:$0xf]
    %v408 = vld [vmem:[#allocation10 + $0x3c] sm:$0xf]
    %v409 = vld [vmem:[#allocation12] sm:$0x1]
    %v411 = vlaneseq
    %v412 = vshrl.u32 %v411, 7
    %v413 = vsub.s32 0, %v412
    %v414 = vrot.slane %v409, %v413
    %v418 = vunpack.c.l.b16 %v391
    %v419 = vunpack.c.l.b16 %v392
    %v420 = vpack.c.b16 %v419, %v418
    %v438 = vunpack.c.l.b16 %v393
    %v439 = vunpack.c.l.b16 %v394
    %v440 = vunpack.c.l.b16 %v395
    %v441 = vunpack.c.l.b16 %v396
    %v442 = vunpack.c.l.b16 %v397
    %v443 = vunpack.c.l.b16 %v398
    %v444 = vunpack.c.l.b16 %v399
    %v445 = vunpack.c.l.b16 %v400
    %v446 = vunpack.c.l.b16 %v401
    %v447 = vunpack.c.l.b16 %v402
    %v448 = vunpack.c.l.b16 %v403
    %v449 = vunpack.c.l.b16 %v404
    %v450 = vunpack.c.l.b16 %v405
    %v451 = vunpack.c.l.b16 %v406
    %v452 = vunpack.c.l.b16 %v407
    %v453 = vunpack.c.l.b16 %v408
    %v454 = vpack.c.b16 %v439, %v438
    %v455 = vpack.c.b16 %v441, %v440
    %v456 = vpack.c.b16 %v443, %v442
    %v457 = vpack.c.b16 %v445, %v444
    %v458 = vpack.c.b16 %v447, %v446
    %v459 = vpack.c.b16 %v449, %v448
    %v460 = vpack.c.b16 %v451, %v450
    %v461 = vpack.c.b16 %v453, %v452
    %470 = vmatprep.subr.bf16.mxu0 0
    %471 = vmatpush1.bf16.msra.mxu0 %v461
    %472 = vmatprep.subr.bf16.mxu0 0
    %473 = vmatpush1.bf16.msra.mxu0 %v460
    %474 = vmatprep.subr.bf16.mxu0 0
    %475 = vmatpush1.bf16.msra.mxu0 %v459
    %476 = vmatprep.subr.bf16.mxu0 0
    %477 = vmatpush1.bf16.msra.mxu0 %v458
    %478 = vmatprep.subr.bf16.mxu0 0
    %479 = vmatpush1.bf16.msra.mxu0 %v457
    %480 = vmatprep.subr.bf16.mxu0 0
    %481 = vmatpush1.bf16.msra.mxu0 %v456
    %482 = vmatprep.subr.bf16.mxu0 0
    %483 = vmatpush1.bf16.msra.mxu0 %v455
    %484 = vmatprep.subr.bf16.mxu0 0
    %485 = vmatpush1.bf16.msra.mxu0 %v454
    %486 = vmatprep.subr.bf16.mxu0 0
    %487 = vmatpush2.bf16.msra.mxu0 0
    %488 = vmatprep.subr.bf16.mxu0 0
    %489 = vmatpush2.bf16.msra.mxu0 0
    %490 = vmatprep.subr.bf16.mxu0 0
    %491 = vmatpush2.bf16.msra.mxu0 0
    %492 = vmatprep.subr.bf16.mxu0 0
    %493 = vmatpush2.bf16.msra.mxu0 0
    %494 = vmatprep.subr.bf16.mxu0 0
    %495 = vmatpush2.bf16.msra.mxu0 0
    %496 = vmatprep.subr.bf16.mxu0 0
    %497 = vmatpush2.bf16.msra.mxu0 0
    %498 = vmatprep.subr.bf16.mxu0 0
    %499 = vmatpush2.bf16.msra.mxu0 0
    %500 = vmatprep.subr.bf16.mxu0 0
    %501 = vmatpush2.bf16.msra.mxu0 0
    %502 = vmatprep.mubr.bf16.mxu0 0
    %503 = vmatmul.mubr.bf16.gmra.mxu0 %v420
    %v504 = vpop.f32.mrf.mxu0
    %v505 = vadd.f32 %v414, %v504
    %v506 = vpop.f32.mrf.mxu0
    %v507 = vpop.f32.mrf.mxu0
    %v508 = vadd.f32 %v414, %v507
    %v509 = vpop.f32.mrf.mxu0
    %510 = vdwg.mxu0
    %v511 = vld [vmem:[%s7] sm:$0xff]
    %v512 = vld [vmem:[%s7 + $0x8] sm:$0xff]
    %v513 = vpack.c.bf16 %v388, %v385
    %v514 = vld [vmem:[#allocation15] sm:$0xf]
    %v515 = vld [vmem:[#allocation15 + $0x4] sm:$0xf]
    %v516 = vld [vmem:[#allocation15 + $0x8] sm:$0xf]
    %v517 = vld [vmem:[#allocation15 + $0xc] sm:$0xf]
    %v518 = vld [vmem:[#allocation15 + $0x10] sm:$0xf]
    %v519 = vld [vmem:[#allocation15 + $0x14] sm:$0xf]
    %v520 = vld [vmem:[#allocation15 + $0x18] sm:$0xf]
    %v521 = vld [vmem:[#allocation15 + $0x1c] sm:$0xf]
    %v522 = vld [vmem:[#allocation15 + $0x20] sm:$0xf]
    %v523 = vld [vmem:[#allocation15 + $0x24] sm:$0xf]
    %v524 = vld [vmem:[#allocation15 + $0x28] sm:$0xf]
    %v525 = vld [vmem:[#allocation15 + $0x2c] sm:$0xf]
    %v526 = vld [vmem:[#allocation15 + $0x30] sm:$0xf]
    %v527 = vld [vmem:[#allocation15 + $0x34] sm:$0xf]
    %v528 = vld [vmem:[#allocation15 + $0x38] sm:$0xf]
    %v529 = vld [vmem:[#allocation15 + $0x3c] sm:$0xf]
    %v530 = vld [vmem:[#allocation16] sm:$0x1]
    %v532 = vlaneseq
    %v533 = vshrl.u32 %v532, 7
    %v534 = vsub.s32 0, %v533
    %v535 = vrot.slane %v530, %v534
    %v553 = vunpack.c.l.b16 %v514
    %v554 = vunpack.c.l.b16 %v515
    %v555 = vunpack.c.l.b16 %v516
    %v556 = vunpack.c.l.b16 %v517
    %v557 = vunpack.c.l.b16 %v518
    %v558 = vunpack.c.l.b16 %v519
    %v559 = vunpack.c.l.b16 %v520
    %v560 = vunpack.c.l.b16 %v521
    %v561 = vunpack.c.l.b16 %v522
    %v562 = vunpack.c.l.b16 %v523
    %v563 = vunpack.c.l.b16 %v524
    %v564 = vunpack.c.l.b16 %v525
    %v565 = vunpack.c.l.b16 %v526
    %v566 = vunpack.c.l.b16 %v527
    %v567 = vunpack.c.l.b16 %v528
    %v568 = vunpack.c.l.b16 %v529
    %v569 = vpack.c.b16 %v554, %v553
    %v570 = vpack.c.b16 %v556, %v555
    %v571 = vpack.c.b16 %v558, %v557
    %v572 = vpack.c.b16 %v560, %v559
    %v573 = vpack.c.b16 %v562, %v561
    %v574 = vpack.c.b16 %v564, %v563
    %v575 = vpack.c.b16 %v566, %v565
    %v576 = vpack.c.b16 %v568, %v567
    %585 = vmatprep.subr.bf16.mxu0 0
    %586 = vmatpush1.bf16.msra.mxu0 %v576
    %587 = vmatprep.subr.bf16.mxu0 0
    %588 = vmatpush1.bf16.msra.mxu0 %v575
    %589 = vmatprep.subr.bf16.mxu0 0
    %590 = vmatpush1.bf16.msra.mxu0 %v574
    %591 = vmatprep.subr.bf16.mxu0 0
    %592 = vmatpush1.bf16.msra.mxu0 %v573
    %593 = vmatprep.subr.bf16.mxu0 0
    %594 = vmatpush1.bf16.msra.mxu0 %v572
    %595 = vmatprep.subr.bf16.mxu0 0
    %596 = vmatpush1.bf16.msra.mxu0 %v571
    %597 = vmatprep.subr.bf16.mxu0 0
    %598 = vmatpush1.bf16.msra.mxu0 %v570
    %599 = vmatprep.subr.bf16.mxu0 0
    %600 = vmatpush1.bf16.msra.mxu0 %v569
    %601 = vmatprep.subr.bf16.mxu0 0
    %602 = vmatpush2.bf16.msra.mxu0 0
    %603 = vmatprep.subr.bf16.mxu0 0
    %604 = vmatpush2.bf16.msra.mxu0 0
    %605 = vmatprep.subr.bf16.mxu0 0
    %606 = vmatpush2.bf16.msra.mxu0 0
    %607 = vmatprep.subr.bf16.mxu0 0
    %608 = vmatpush2.bf16.msra.mxu0 0
    %609 = vmatprep.subr.bf16.mxu0 0
    %610 = vmatpush2.bf16.msra.mxu0 0
    %611 = vmatprep.subr.bf16.mxu0 0
    %612 = vmatpush2.bf16.msra.mxu0 0
    %613 = vmatprep.subr.bf16.mxu0 0
    %614 = vmatpush2.bf16.msra.mxu0 0
    %615 = vmatprep.subr.bf16.mxu0 0
    %616 = vmatpush2.bf16.msra.mxu0 0
    %617 = vmatprep.mubr.bf16.mxu0 0
    %618 = vmatmul.mubr.bf16.gmra.mxu0 %v513
    %v619 = vpop.f32.mrf.mxu0
    %v620 = vadd.f32 %v535, %v619
    %v621 = vpop.f32.mrf.mxu0
    %v622 = vpop.f32.mrf.mxu0
    %v623 = vadd.f32 %v535, %v622
    %v624 = vpop.f32.mrf.mxu0
    %625 = vdwg.mxu0
    %v626 = vxor.u32 %v620, 2147483648
    %v627 = vxor.u32 %v623, 2147483648
    %v628 = vmul.f32 %v626, 1.442695
    %v629 = vpow.pop %v628
    %v630 = vmul.f32 %v627, 1.442695
    %v631 = vpow.pop %v630
    %v632 = vadd.f32 %v629, 1.0
    %v633 = vadd.f32 %v631, 1.0
    %v634 = vrcp.pop %v632
    %v635 = vmul.f32 1.0, %v634
    %v636 = vrcp.pop %v633
    %v637 = vmul.f32 1.0, %v636
    %v638 = vmul.f32 %v511, %v635
    %v639 = vmul.f32 %v512, %v637
    %v640 = vpack.c.bf16 %v508, %v505
    %v641 = vld [vmem:[#allocation18] sm:$0xf]
    %v642 = vld [vmem:[#allocation18 + $0x4] sm:$0xf]
    %v643 = vld [vmem:[#allocation18 + $0x8] sm:$0xf]
    %v644 = vld [vmem:[#allocation18 + $0xc] sm:$0xf]
    %v645 = vld [vmem:[#allocation18 + $0x10] sm:$0xf]
    %v646 = vld [vmem:[#allocation18 + $0x14] sm:$0xf]
    %v647 = vld [vmem:[#allocation18 + $0x18] sm:$0xf]
    %v648 = vld [vmem:[#allocation18 + $0x1c] sm:$0xf]
    %v649 = vld [vmem:[#allocation18 + $0x20] sm:$0xf]
    %v650 = vld [vmem:[#allocation18 + $0x24] sm:$0xf]
    %v651 = vld [vmem:[#allocation18 + $0x28] sm:$0xf]
    %v652 = vld [vmem:[#allocation18 + $0x2c] sm:$0xf]
    %v653 = vld [vmem:[#allocation18 + $0x30] sm:$0xf]
    %v654 = vld [vmem:[#allocation18 + $0x34] sm:$0xf]
    %v655 = vld [vmem:[#allocation18 + $0x38] sm:$0xf]
    %v656 = vld [vmem:[#allocation18 + $0x3c] sm:$0xf]
    %v657 = vld [vmem:[#allocation19] sm:$0x1]
    %v659 = vlaneseq
    %v660 = vshrl.u32 %v659, 7
    %v661 = vsub.s32 0, %v660
    %v662 = vrot.slane %v657, %v661
    %v680 = vunpack.c.l.b16 %v641
    %v681 = vunpack.c.l.b16 %v642
    %v682 = vunpack.c.l.b16 %v643
    %v683 = vunpack.c.l.b16 %v644
    %v684 = vunpack.c.l.b16 %v645
    %v685 = vunpack.c.l.b16 %v646
    %v686 = vunpack.c.l.b16 %v647
    %v687 = vunpack.c.l.b16 %v648
    %v688 = vunpack.c.l.b16 %v649
    %v689 = vunpack.c.l.b16 %v650
    %v690 = vunpack.c.l.b16 %v651
    %v691 = vunpack.c.l.b16 %v652
    %v692 = vunpack.c.l.b16 %v653
    %v693 = vunpack.c.l.b16 %v654
    %v694 = vunpack.c.l.b16 %v655
    %v695 = vunpack.c.l.b16 %v656
    %v696 = vpack.c.b16 %v681, %v680
    %v697 = vpack.c.b16 %v683, %v682
    %v698 = vpack.c.b16 %v685, %v684
    %v699 = vpack.c.b16 %v687, %v686
    %v700 = vpack.c.b16 %v689, %v688
    %v701 = vpack.c.b16 %v691, %v690
    %v702 = vpack.c.b16 %v693, %v692
    %v703 = vpack.c.b16 %v695, %v694
    %712 = vmatprep.subr.bf16.mxu0 0
    %713 = vmatpush1.bf16.msra.mxu0 %v703
    %714 = vmatprep.subr.bf16.mxu0 0
    %715 = vmatpush1.bf16.msra.mxu0 %v702
    %716 = vmatprep.subr.bf16.mxu0 0
    %717 = vmatpush1.bf16.msra.mxu0 %v701
    %718 = vmatprep.subr.bf16.mxu0 0
    %719 = vmatpush1.bf16.msra.mxu0 %v700
    %720 = vmatprep.subr.bf16.mxu0 0
    %721 = vmatpush1.bf16.msra.mxu0 %v699
    %722 = vmatprep.subr.bf16.mxu0 0
    %723 = vmatpush1.bf16.msra.mxu0 %v698
    %724 = vmatprep.subr.bf16.mxu0 0
    %725 = vmatpush1.bf16.msra.mxu0 %v697
    %726 = vmatprep.subr.bf16.mxu0 0
    %727 = vmatpush1.bf16.msra.mxu0 %v696
    %728 = vmatprep.subr.bf16.mxu0 0
    %729 = vmatpush2.bf16.msra.mxu0 0
    %730 = vmatprep.subr.bf16.mxu0 0
    %731 = vmatpush2.bf16.msra.mxu0 0
    %732 = vmatprep.subr.bf16.mxu0 0
    %733 = vmatpush2.bf16.msra.mxu0 0
    %734 = vmatprep.subr.bf16.mxu0 0
    %735 = vmatpush2.bf16.msra.mxu0 0
    %736 = vmatprep.subr.bf16.mxu0 0
    %737 = vmatpush2.bf16.msra.mxu0 0
    %738 = vmatprep.subr.bf16.mxu0 0
    %739 = vmatpush2.bf16.msra.mxu0 0
    %740 = vmatprep.subr.bf16.mxu0 0
    %741 = vmatpush2.bf16.msra.mxu0 0
    %742 = vmatprep.subr.bf16.mxu0 0
    %743 = vmatpush2.bf16.msra.mxu0 0
    %744 = vmatprep.mubr.bf16.mxu0 0
    %745 = vmatmul.mubr.bf16.gmra.mxu0 %v640
    %v746 = vpop.f32.mrf.mxu0
    %v747 = vadd.f32 %v662, %v746
    %v748 = vpop.f32.mrf.mxu0
    %v749 = vpop.f32.mrf.mxu0
    %v750 = vadd.f32 %v662, %v749
    %v751 = vpop.f32.mrf.mxu0
    %752 = vdwg.mxu0
    %v753 = vxor.u32 %v747, 2147483648
    %v754 = vxor.u32 %v750, 2147483648
    %v755 = vmul.f32 %v753, 1.442695
    %v756 = vpow.pop %v755
    %v757 = vmul.f32 %v754, 1.442695
    %v758 = vpow.pop %v757
    %v759 = vadd.f32 %v756, 1.0
    %v760 = vadd.f32 %v758, 1.0
    %v761 = vrcp.pop %v759
    %v762 = vmul.f32 1.0, %v761
    %v763 = vrcp.pop %v760
    %v764 = vmul.f32 1.0, %v763
    %v765 = vmul.f32 %v511, %v762
    %v766 = vmul.f32 %v512, %v764
    %v767 = vld [vmem:[#allocation21] sm:$0xf]
    %v768 = vld [vmem:[%s13] sm:$0xf]
    %v769 = vld [vmem:[%s13 + $0x4] sm:$0xf]
    %v770 = vld [vmem:[#allocation13] sm:$0xff]
    %v771 = vpack.c.bf16 %v512, %v511
    %vm772 = vcmask 130048
    %v774 = vsel %vm772, %v767, 0
    %776 = vmatprep.subr.bf16.mxu0 0
    %777 = vmatpush1.bf16.msra.mxu0 0
    %778 = vmatprep.subr.bf16.mxu0 0
    %779 = vmatpush1.bf16.msra.mxu0 0
    %780 = vmatprep.subr.bf16.mxu0 0
    %781 = vmatpush1.bf16.msra.mxu0 0
    %782 = vmatprep.subr.bf16.mxu0 0
    %783 = vmatpush1.bf16.msra.mxu0 0
    %784 = vmatprep.subr.bf16.mxu0 0
    %785 = vmatpush1.bf16.msra.mxu0 0
    %786 = vmatprep.subr.bf16.mxu0 0
    %787 = vmatpush1.bf16.msra.mxu0 0
    %788 = vmatprep.subr.bf16.mxu0 0
    %789 = vmatpush1.bf16.msra.mxu0 0
    %790 = vmatprep.subr.bf16.mxu0 0
    %791 = vmatpush1.bf16.msra.mxu0 %v771
    %792 = vmatprep.subr.bf16.mxu0 0
    %793 = vmatpush2.bf16.msra.mxu0 0
    %794 = vmatprep.subr.bf16.mxu0 0
    %795 = vmatpush2.bf16.msra.mxu0 0
    %796 = vmatprep.subr.bf16.mxu0 0
    %797 = vmatpush2.bf16.msra.mxu0 0
    %798 = vmatprep.subr.bf16.mxu0 0
    %799 = vmatpush2.bf16.msra.mxu0 0
    %800 = vmatprep.subr.bf16.mxu0 0
    %801 = vmatpush2.bf16.msra.mxu0 0
    %802 = vmatprep.subr.bf16.mxu0 0
    %803 = vmatpush2.bf16.msra.mxu0 0
    %804 = vmatprep.subr.bf16.mxu0 0
    %805 = vmatpush2.bf16.msra.mxu0 0
    %806 = vmatprep.subr.bf16.mxu0 0
    %807 = vmatpush2.bf16.msra.mxu0 0
    %808 = vmatprep.mubr.bf16.mxu0 0
    %809 = vmatmul.mubr.bf16.gmra.mxu0 %v774
    %v810 = vpop.f32.mrf.mxu0
    %v811 = vadd.f32 0.0, %v810
    %v812 = vpop.f32.mrf.mxu0
    %v813 = vpop.f32.mrf.mxu0
    %v814 = vpop.f32.mrf.mxu0
    %815 = vdwg.mxu0
    %v816 = vpack.c.bf16 %v770, %v770
    %v819 = vunpack.c.l.b16 %v768
    %v820 = vunpack.c.l.b16 %v769
    %v821 = vpack.c.b16 %v820, %v819
    %vm822 = vcmask 64512
    %v824 = vsel %vm822, %v821, 0
    %vm826 = vcmask 1043456
    %v828 = vsel %vm826, %v816, 0
    %830 = vmatprep.subr.bf16.mxu0 0
    %831 = vmatpush1.bf16.msra.mxu0 0
    %832 = vmatprep.subr.bf16.mxu0 0
    %833 = vmatpush1.bf16.msra.mxu0 0
    %834 = vmatprep.subr.bf16.mxu0 0
    %835 = vmatpush1.bf16.msra.mxu0 0
    %836 = vmatprep.subr.bf16.mxu0 0
    %837 = vmatpush1.bf16.msra.mxu0 0
    %838 = vmatprep.subr.bf16.mxu0 0
    %839 = vmatpush1.bf16.msra.mxu0 0
    %840 = vmatprep.subr.bf16.mxu0 0
    %841 = vmatpush1.bf16.msra.mxu0 0
    %842 = vmatprep.subr.bf16.mxu0 0
    %843 = vmatpush1.bf16.msra.mxu0 0
    %844 = vmatprep.subr.bf16.mxu0 0
    %845 = vmatpush1.bf16.msra.mxu0 %v828
    %846 = vmatprep.subr.bf16.mxu0 0
    %847 = vmatpush2.bf16.msra.mxu0 0
    %848 = vmatprep.subr.bf16.mxu0 0
    %849 = vmatpush2.bf16.msra.mxu0 0
    %850 = vmatprep.subr.bf16.mxu0 0
    %851 = vmatpush2.bf16.msra.mxu0 0
    %852 = vmatprep.subr.bf16.mxu0 0
    %853 = vmatpush2.bf16.msra.mxu0 0
    %854 = vmatprep.subr.bf16.mxu0 0
    %855 = vmatpush2.bf16.msra.mxu0 0
    %856 = vmatprep.subr.bf16.mxu0 0
    %857 = vmatpush2.bf16.msra.mxu0 0
    %858 = vmatprep.subr.bf16.mxu0 0
    %859 = vmatpush2.bf16.msra.mxu0 0
    %860 = vmatprep.subr.bf16.mxu0 0
    %861 = vmatpush2.bf16.msra.mxu0 0
    %862 = vmatprep.mubr.bf16.mxu0 0
    %863 = vmatmul.mubr.bf16.gmra.mxu0 %v824
    %v864 = vpop.f32.mrf.mxu0
    %v865 = vadd.f32 0.0, %v864
    %v866 = vpop.f32.mrf.mxu0
    %v867 = vpop.f32.mrf.mxu0
    %v868 = vadd.f32 0.0, %v867
    %v869 = vpop.f32.mrf.mxu0
    %870 = vdwg.mxu0
    %v871 = vpack.c.bf16 %v868, %v865
    %872 = vmatprep.subr.bf16.mxu0 0
    %873 = vmatpush1.bf16.msra.mxu0 0
    %874 = vmatprep.subr.bf16.mxu0 0
    %875 = vmatpush1.bf16.msra.mxu0 0
    %876 = vmatprep.subr.bf16.mxu0 0
    %877 = vmatpush1.bf16.msra.mxu0 0
    %878 = vmatprep.subr.bf16.mxu0 0
    %879 = vmatpush1.bf16.msra.mxu0 0
    %880 = vmatprep.subr.bf16.mxu0 0
    %881 = vmatpush1.bf16.msra.mxu0 0
    %882 = vmatprep.subr.bf16.mxu0 0
    %883 = vmatpush1.bf16.msra.mxu0 0
    %884 = vmatprep.subr.bf16.mxu0 0
    %885 = vmatpush1.bf16.msra.mxu0 0
    %886 = vmatprep.subr.bf16.mxu0 0
    %887 = vmatpush1.bf16.msra.mxu0 %v871
    %888 = vmatprep.subr.bf16.mxu0 0
    %889 = vmatpush2.bf16.msra.mxu0 0
    %890 = vmatprep.subr.bf16.mxu0 0
    %891 = vmatpush2.bf16.msra.mxu0 0
    %892 = vmatprep.subr.bf16.mxu0 0
    %893 = vmatpush2.bf16.msra.mxu0 0
    %894 = vmatprep.subr.bf16.mxu0 0
    %895 = vmatpush2.bf16.msra.mxu0 0
    %896 = vmatprep.subr.bf16.mxu0 0
    %897 = vmatpush2.bf16.msra.mxu0 0
    %898 = vmatprep.subr.bf16.mxu0 0
    %899 = vmatpush2.bf16.msra.mxu0 0
    %900 = vmatprep.subr.bf16.mxu0 0
    %901 = vmatpush2.bf16.msra.mxu0 0
    %902 = vmatprep.subr.bf16.mxu0 0
    %903 = vmatpush2.bf16.msra.mxu0 0
    %904 = vmatprep.mubr.bf16.mxu0 0
    %905 = vmatmul.mubr.bf16.gmra.mxu0 %v774
    %v906 = vpop.f32.mrf.mxu0
    %v907 = vadd.f32 0.0, %v906
    %v908 = vpop.f32.mrf.mxu0
    %v909 = vpop.f32.mrf.mxu0
    %v910 = vpop.f32.mrf.mxu0
    %911 = vdwg.mxu0
    %v912 = vpack.c.bf16 %v811, %v811
    %v914 = vsel %vm826, %v912, 0
    %916 = vmatprep.subr.bf16.mxu0 0
    %917 = vmatpush1.bf16.msra.mxu0 0
    %918 = vmatprep.subr.bf16.mxu0 0
    %919 = vmatpush1.bf16.msra.mxu0 0
    %920 = vmatprep.subr.bf16.mxu0 0
    %921 = vmatpush1.bf16.msra.mxu0 0
    %922 = vmatprep.subr.bf16.mxu0 0
    %923 = vmatpush1.bf16.msra.mxu0 0
    %924 = vmatprep.subr.bf16.mxu0 0
    %925 = vmatpush1.bf16.msra.mxu0 0
    %926 = vmatprep.subr.bf16.mxu0 0
    %927 = vmatpush1.bf16.msra.mxu0 0
    %928 = vmatprep.subr.bf16.mxu0 0
    %929 = vmatpush1.bf16.msra.mxu0 0
    %930 = vmatprep.subr.bf16.mxu0 0
    %931 = vmatpush1.bf16.msra.mxu0 %v914
    %932 = vmatprep.subr.bf16.mxu0 0
    %933 = vmatpush2.bf16.msra.mxu0 0
    %934 = vmatprep.subr.bf16.mxu0 0
    %935 = vmatpush2.bf16.msra.mxu0 0
    %936 = vmatprep.subr.bf16.mxu0 0
    %937 = vmatpush2.bf16.msra.mxu0 0
    %938 = vmatprep.subr.bf16.mxu0 0
    %939 = vmatpush2.bf16.msra.mxu0 0
    %940 = vmatprep.subr.bf16.mxu0 0
    %941 = vmatpush2.bf16.msra.mxu0 0
    %942 = vmatprep.subr.bf16.mxu0 0
    %943 = vmatpush2.bf16.msra.mxu0 0
    %944 = vmatprep.subr.bf16.mxu0 0
    %945 = vmatpush2.bf16.msra.mxu0 0
    %946 = vmatprep.subr.bf16.mxu0 0
    %947 = vmatpush2.bf16.msra.mxu0 0
    %948 = vmatprep.mubr.bf16.mxu0 0
    %949 = vmatmul.mubr.bf16.gmra.mxu0 %v824
    %v950 = vpop.f32.mrf.mxu0
    %v951 = vadd.f32 0.0, %v950
    %v952 = vpop.f32.mrf.mxu0
    %v953 = vpop.f32.mrf.mxu0
    %v954 = vadd.f32 0.0, %v953
    %v955 = vpop.f32.mrf.mxu0
    %956 = vdwg.mxu0
    %v957 = vadd.f32 %v770, %v811
    %v958 = vadd.f32 %v957, %v907
    %v959 = vrcp.pop 3.0
    %v960 = vmul.f32 %v958, %v959
    %961 = vst [vmem:[#allocation31] sm:$0xff] %v960
    %v962 = vadd.f32 %v511, %v865
    %v963 = vadd.f32 %v512, %v868
    %v964 = vadd.f32 %v962, %v951
    %v965 = vadd.f32 %v963, %v954
    %v966 = vmul.f32 %v964, %v959
    %v967 = vmul.f32 %v965, %v959
    %968 = vst [vmem:[#allocation31 + $0x8] sm:$0xff] %v966
    %969 = vst [vmem:[#allocation31 + $0x10] sm:$0xff] %v967
    %v970 = vld [vmem:[%s14] sm:$0xf]
    %v971 = vld [vmem:[%s14 + $0x4] sm:$0xf]
    %v972 = vpack.c.bf16 %v639, %v638
    %v975 = vunpack.c.l.b16 %v970
    %v976 = vunpack.c.l.b16 %v971
    %v977 = vpack.c.b16 %v976, %v975
    %v979 = vsel %vm772, %v977, 0
    %981 = vmatprep.subr.bf16.mxu0 0
    %982 = vmatpush1.bf16.msra.mxu0 0
    %983 = vmatprep.subr.bf16.mxu0 0
    %984 = vmatpush1.bf16.msra.mxu0 0
    %985 = vmatprep.subr.bf16.mxu0 0
    %986 = vmatpush1.bf16.msra.mxu0 0
    %987 = vmatprep.subr.bf16.mxu0 0
    %988 = vmatpush1.bf16.msra.mxu0 0
    %989 = vmatprep.subr.bf16.mxu0 0
    %990 = vmatpush1.bf16.msra.mxu0 0
    %991 = vmatprep.subr.bf16.mxu0 0
    %992 = vmatpush1.bf16.msra.mxu0 0
    %993 = vmatprep.subr.bf16.mxu0 0
    %994 = vmatpush1.bf16.msra.mxu0 0
    %995 = vmatprep.subr.bf16.mxu0 0
    %996 = vmatpush1.bf16.msra.mxu0 %v972
    %997 = vmatprep.subr.bf16.mxu0 0
    %998 = vmatpush2.bf16.msra.mxu0 0
    %999 = vmatprep.subr.bf16.mxu0 0
    %1000 = vmatpush2.bf16.msra.mxu0 0
    %1001 = vmatprep.subr.bf16.mxu0 0
    %1002 = vmatpush2.bf16.msra.mxu0 0
    %1003 = vmatprep.subr.bf16.mxu0 0
    %1004 = vmatpush2.bf16.msra.mxu0 0
    %1005 = vmatprep.subr.bf16.mxu0 0
    %1006 = vmatpush2.bf16.msra.mxu0 0
    %1007 = vmatprep.subr.bf16.mxu0 0
    %1008 = vmatpush2.bf16.msra.mxu0 0
    %1009 = vmatprep.subr.bf16.mxu0 0
    %1010 = vmatpush2.bf16.msra.mxu0 0
    %1011 = vmatprep.subr.bf16.mxu0 0
    %1012 = vmatpush2.bf16.msra.mxu0 0
    %1013 = vmatprep.mubr.bf16.mxu0 0
    %1014 = vmatmul.mubr.bf16.gmra.mxu0 %v979
    %v1015 = vpop.f32.mrf.mxu0
    %v1016 = vadd.f32 0.0, %v1015
    %v1017 = vpop.f32.mrf.mxu0
    %v1018 = vpop.f32.mrf.mxu0
    %v1019 = vadd.f32 0.0, %v1018
    %v1020 = vpop.f32.mrf.mxu0
    %1021 = vdwg.mxu0
    %v1022 = vld [vmem:[#allocation22] sm:$0xf]
    %v1023 = vld [vmem:[#allocation22 + $0x4] sm:$0xf]
    %v1024 = vpack.c.bf16 %v766, %v765
    %v1027 = vunpack.c.l.b16 %v1022
    %v1028 = vunpack.c.l.b16 %v1023
    %v1029 = vpack.c.b16 %v1028, %v1027
    %v1031 = vsel %vm772, %v1029, 0
    %1033 = vmatprep.subr.bf16.mxu0 0
    %1034 = vmatpush1.bf16.msra.mxu0 0
    %1035 = vmatprep.subr.bf16.mxu0 0
    %1036 = vmatpush1.bf16.msra.mxu0 0
    %1037 = vmatprep.subr.bf16.mxu0 0
    %1038 = vmatpush1.bf16.msra.mxu0 0
    %1039 = vmatprep.subr.bf16.mxu0 0
    %1040 = vmatpush1.bf16.msra.mxu0 0
    %1041 = vmatprep.subr.bf16.mxu0 0
    %1042 = vmatpush1.bf16.msra.mxu0 0
    %1043 = vmatprep.subr.bf16.mxu0 0
    %1044 = vmatpush1.bf16.msra.mxu0 0
    %1045 = vmatprep.subr.bf16.mxu0 0
    %1046 = vmatpush1.bf16.msra.mxu0 0
    %1047 = vmatprep.subr.bf16.mxu0 0
    %1048 = vmatpush1.bf16.msra.mxu0 %v1024
    %1049 = vmatprep.subr.bf16.mxu0 0
    %1050 = vmatpush2.bf16.msra.mxu0 0
    %1051 = vmatprep.subr.bf16.mxu0 0
    %1052 = vmatpush2.bf16.msra.mxu0 0
    %1053 = vmatprep.subr.bf16.mxu0 0
    %1054 = vmatpush2.bf16.msra.mxu0 0
    %1055 = vmatprep.subr.bf16.mxu0 0
    %1056 = vmatpush2.bf16.msra.mxu0 0
    %1057 = vmatprep.subr.bf16.mxu0 0
    %1058 = vmatpush2.bf16.msra.mxu0 0
    %1059 = vmatprep.subr.bf16.mxu0 0
    %1060 = vmatpush2.bf16.msra.mxu0 0
    %1061 = vmatprep.subr.bf16.mxu0 0
    %1062 = vmatpush2.bf16.msra.mxu0 0
    %1063 = vmatprep.subr.bf16.mxu0 0
    %1064 = vmatpush2.bf16.msra.mxu0 0
    %1065 = vmatprep.mubr.bf16.mxu0 0
    %1066 = vmatmul.mubr.bf16.gmra.mxu0 %v1031
    %v1067 = vpop.f32.mrf.mxu0
    %v1068 = vadd.f32 0.0, %v1067
    %v1069 = vpop.f32.mrf.mxu0
    %v1070 = vpop.f32.mrf.mxu0
    %v1071 = vadd.f32 0.0, %v1070
    %v1072 = vpop.f32.mrf.mxu0
    %1073 = vdwg.mxu0
    %v1074 = vpack.c.bf16 %v1019, %v1016
    %1075 = vmatprep.subr.bf16.mxu0 0
    %1076 = vmatpush1.bf16.msra.mxu0 0
    %1077 = vmatprep.subr.bf16.mxu0 0
    %1078 = vmatpush1.bf16.msra.mxu0 0
    %1079 = vmatprep.subr.bf16.mxu0 0
    %1080 = vmatpush1.bf16.msra.mxu0 0
    %1081 = vmatprep.subr.bf16.mxu0 0
    %1082 = vmatpush1.bf16.msra.mxu0 0
    %1083 = vmatprep.subr.bf16.mxu0 0
    %1084 = vmatpush1.bf16.msra.mxu0 0
    %1085 = vmatprep.subr.bf16.mxu0 0
    %1086 = vmatpush1.bf16.msra.mxu0 0
    %1087 = vmatprep.subr.bf16.mxu0 0
    %1088 = vmatpush1.bf16.msra.mxu0 0
    %1089 = vmatprep.subr.bf16.mxu0 0
    %1090 = vmatpush1.bf16.msra.mxu0 %v1074
    %1091 = vmatprep.subr.bf16.mxu0 0
    %1092 = vmatpush2.bf16.msra.mxu0 0
    %1093 = vmatprep.subr.bf16.mxu0 0
    %1094 = vmatpush2.bf16.msra.mxu0 0
    %1095 = vmatprep.subr.bf16.mxu0 0
    %1096 = vmatpush2.bf16.msra.mxu0 0
    %1097 = vmatprep.subr.bf16.mxu0 0
    %1098 = vmatpush2.bf16.msra.mxu0 0
    %1099 = vmatprep.subr.bf16.mxu0 0
    %1100 = vmatpush2.bf16.msra.mxu0 0
    %1101 = vmatprep.subr.bf16.mxu0 0
    %1102 = vmatpush2.bf16.msra.mxu0 0
    %1103 = vmatprep.subr.bf16.mxu0 0
    %1104 = vmatpush2.bf16.msra.mxu0 0
    %1105 = vmatprep.subr.bf16.mxu0 0
    %1106 = vmatpush2.bf16.msra.mxu0 0
    %1107 = vmatprep.mubr.bf16.mxu0 0
    %1108 = vmatmul.mubr.bf16.gmra.mxu0 %v774
    %v1109 = vpop.f32.mrf.mxu0
    %v1110 = vadd.f32 0.0, %v1109
    %v1111 = vpop.f32.mrf.mxu0
    %v1112 = vpop.f32.mrf.mxu0
    %v1113 = vpop.f32.mrf.mxu0
    %1114 = vdwg.mxu0
    %1115 = vst [vmem:[#allocation2] sm:$0xff] %v1110
    %1116 = vst [vmem:[#allocation2 + $0x8] sm:$0xff] %v1016
    %1117 = vst [vmem:[#allocation2 + $0x10] sm:$0xff] %v1019
    %v1118 = vpack.c.bf16 %v1071, %v1068
    %1119 = vmatprep.subr.bf16.mxu0 0
    %1120 = vmatpush1.bf16.msra.mxu0 0
    %1121 = vmatprep.subr.bf16.mxu0 0
    %1122 = vmatpush1.bf16.msra.mxu0 0
    %1123 = vmatprep.subr.bf16.mxu0 0
    %1124 = vmatpush1.bf16.msra.mxu0 0
    %1125 = vmatprep.subr.bf16.mxu0 0
    %1126 = vmatpush1.bf16.msra.mxu0 0
    %1127 = vmatprep.subr.bf16.mxu0 0
    %1128 = vmatpush1.bf16.msra.mxu0 0
    %1129 = vmatprep.subr.bf16.mxu0 0
    %1130 = vmatpush1.bf16.msra.mxu0 0
    %1131 = vmatprep.subr.bf16.mxu0 0
    %1132 = vmatpush1.bf16.msra.mxu0 0
    %1133 = vmatprep.subr.bf16.mxu0 0
    %1134 = vmatpush1.bf16.msra.mxu0 %v1118
    %1135 = vmatprep.subr.bf16.mxu0 0
    %1136 = vmatpush2.bf16.msra.mxu0 0
    %1137 = vmatprep.subr.bf16.mxu0 0
    %1138 = vmatpush2.bf16.msra.mxu0 0
    %1139 = vmatprep.subr.bf16.mxu0 0
    %1140 = vmatpush2.bf16.msra.mxu0 0
    %1141 = vmatprep.subr.bf16.mxu0 0
    %1142 = vmatpush2.bf16.msra.mxu0 0
    %1143 = vmatprep.subr.bf16.mxu0 0
    %1144 = vmatpush2.bf16.msra.mxu0 0
    %1145 = vmatprep.subr.bf16.mxu0 0
    %1146 = vmatpush2.bf16.msra.mxu0 0
    %1147 = vmatprep.subr.bf16.mxu0 0
    %1148 = vmatpush2.bf16.msra.mxu0 0
    %1149 = vmatprep.subr.bf16.mxu0 0
    %1150 = vmatpush2.bf16.msra.mxu0 0
    %1151 = vmatprep.mubr.bf16.mxu0 0
    %1152 = vmatmul.mubr.bf16.gmra.mxu0 %v774
    %v1153 = vpop.f32.mrf.mxu0
    %v1154 = vadd.f32 0.0, %v1153
    %v1155 = vpop.f32.mrf.mxu0
    %v1156 = vpop.f32.mrf.mxu0
    %v1157 = vpop.f32.mrf.mxu0
    %1158 = vdwg.mxu0
    %1159 = vst [vmem:[#allocation3] sm:$0xff] %v1154
    %1160 = vst [vmem:[#allocation3 + $0x8] sm:$0xff] %v1068
    %1161 = vst [vmem:[#allocation3 + $0x10] sm:$0xff] %v1071
    %v1162 = vld [vmem:[#allocation2] sm:$0xff]
    %v1163 = vld [vmem:[#allocation2 + $0x8] sm:$0xff]
    %v1164 = vld [vmem:[#allocation2 + $0x10] sm:$0xff]
    %v1165 = vld [vmem:[#allocation3] sm:$0xff]
    %v1166 = vld [vmem:[#allocation3 + $0x8] sm:$0xff]
    %v1167 = vld [vmem:[#allocation3 + $0x10] sm:$0xff]
    %v1168 = vpack.c.bf16 %v1163, %v1162
    %v1169 = vpack.c.bf16 %v1164, %v1164
    %v1170 = vld [vmem:[#allocation24] sm:$0xf]
    %v1171 = vld [vmem:[#allocation24 + $0x4] sm:$0xf]
    %v1172 = vld [vmem:[#allocation24 + $0x8] sm:$0xf]
    %v1173 = vld [vmem:[#allocation24 + $0xc] sm:$0xf]
    %v1174 = vld [vmem:[#allocation24 + $0x10] sm:$0xf]
    %v1175 = vld [vmem:[#allocation24 + $0x14] sm:$0xf]
    %v1176 = vld [vmem:[#allocation24 + $0x18] sm:$0xf]
    %v1177 = vld [vmem:[#allocation24 + $0x1c] sm:$0xf]
    %v1178 = vld [vmem:[#allocation24 + $0x20] sm:$0xf]
    %v1179 = vld [vmem:[#allocation24 + $0x24] sm:$0xf]
    %v1180 = vld [vmem:[#allocation24 + $0x28] sm:$0xf]
    %v1181 = vld [vmem:[#allocation24 + $0x2c] sm:$0xf]
    %v1182 = vld [vmem:[#allocation24 + $0x30] sm:$0xf]
    %v1183 = vld [vmem:[#allocation24 + $0x34] sm:$0xf]
    %v1184 = vld [vmem:[#allocation24 + $0x38] sm:$0xf]
    %v1185 = vld [vmem:[#allocation24 + $0x3c] sm:$0xf]
    %v1186 = vld [vmem:[%s17] sm:$0x1]
    %v1188 = vlaneseq
    %v1189 = vshrl.u32 %v1188, 7
    %v1190 = vsub.s32 0, %v1189
    %v1191 = vrot.slane %v1186, %v1190
    %v1209 = vunpack.c.l.b16 %v1170
    %v1210 = vunpack.c.l.b16 %v1171
    %v1211 = vunpack.c.l.b16 %v1172
    %v1212 = vunpack.c.l.b16 %v1173
    %v1213 = vunpack.c.l.b16 %v1174
    %v1214 = vunpack.c.l.b16 %v1175
    %v1215 = vunpack.c.l.b16 %v1176
    %v1216 = vunpack.c.l.b16 %v1177
    %v1217 = vunpack.c.l.b16 %v1178
    %v1218 = vunpack.c.l.b16 %v1179
    %v1219 = vunpack.c.l.b16 %v1180
    %v1220 = vunpack.c.l.b16 %v1181
    %v1221 = vunpack.c.l.b16 %v1182
    %v1222 = vunpack.c.l.b16 %v1183
    %v1223 = vunpack.c.l.b16 %v1184
    %v1224 = vunpack.c.l.b16 %v1185
    %v1225 = vpack.c.b16 %v1210, %v1209
    %v1226 = vpack.c.b16 %v1212, %v1211
    %v1227 = vpack.c.b16 %v1214, %v1213
    %v1228 = vpack.c.b16 %v1216, %v1215
    %v1229 = vpack.c.b16 %v1218, %v1217
    %v1230 = vpack.c.b16 %v1220, %v1219
    %v1231 = vpack.c.b16 %v1222, %v1221
    %v1232 = vpack.c.b16 %v1224, %v1223
    %1241 = vmatprep.subr.bf16.mxu0 0
    %1242 = vmatpush1.bf16.msra.mxu0 %v1232
    %1243 = vmatprep.subr.bf16.mxu0 0
    %1244 = vmatpush1.bf16.msra.mxu0 %v1231
    %1245 = vmatprep.subr.bf16.mxu0 0
    %1246 = vmatpush1.bf16.msra.mxu0 %v1230
    %1247 = vmatprep.subr.bf16.mxu0 0
    %1248 = vmatpush1.bf16.msra.mxu0 %v1229
    %1249 = vmatprep.subr.bf16.mxu0 0
    %1250 = vmatpush1.bf16.msra.mxu0 %v1228
    %1251 = vmatprep.subr.bf16.mxu0 0
    %1252 = vmatpush1.bf16.msra.mxu0 %v1227
    %1253 = vmatprep.subr.bf16.mxu0 0
    %1254 = vmatpush1.bf16.msra.mxu0 %v1226
    %1255 = vmatprep.subr.bf16.mxu0 0
    %1256 = vmatpush1.bf16.msra.mxu0 %v1225
    %1257 = vmatprep.subr.bf16.mxu0 0
    %1258 = vmatpush2.bf16.msra.mxu0 0
    %1259 = vmatprep.subr.bf16.mxu0 0
    %1260 = vmatpush2.bf16.msra.mxu0 0
    %1261 = vmatprep.subr.bf16.mxu0 0
    %1262 = vmatpush2.bf16.msra.mxu0 0
    %1263 = vmatprep.subr.bf16.mxu0 0
    %1264 = vmatpush2.bf16.msra.mxu0 0
    %1265 = vmatprep.subr.bf16.mxu0 0
    %1266 = vmatpush2.bf16.msra.mxu0 0
    %1267 = vmatprep.subr.bf16.mxu0 0
    %1268 = vmatpush2.bf16.msra.mxu0 0
    %1269 = vmatprep.subr.bf16.mxu0 0
    %1270 = vmatpush2.bf16.msra.mxu0 0
    %1271 = vmatprep.subr.bf16.mxu0 0
    %1272 = vmatpush2.bf16.msra.mxu0 0
    %1273 = vmatprep.mubr.bf16.mxu0 0
    %1274 = vmatmul.mubr.bf16.gmra.mxu0 %v1168
    %v1275 = vpop.f32.mrf.mxu0
    %v1276 = vadd.f32 %v1191, %v1275
    %v1277 = vpop.f32.mrf.mxu0
    %v1278 = vpop.f32.mrf.mxu0
    %v1279 = vadd.f32 %v1191, %v1278
    %v1280 = vpop.f32.mrf.mxu0
    %1281 = vmatprep.mubr.bf16.mxu0 0
    %1282 = vmatmul.mubr.bf16.gmra.mxu0 %v1169
    %v1283 = vpop.f32.mrf.mxu0
    %v1284 = vadd.f32 %v1191, %v1283
    %v1285 = vpop.f32.mrf.mxu0
    %v1286 = vpop.f32.mrf.mxu0
    %v1287 = vpop.f32.mrf.mxu0
    %1288 = vdwg.mxu0
    %v1289 = vtanh.pop %v1276
    %v1290 = vtanh.pop %v1279
    %v1291 = vtanh.pop %v1284
    %v1292 = vpack.c.bf16 %v1166, %v1165
    %v1293 = vpack.c.bf16 %v1167, %v1167
    %1294 = vmatprep.subr.bf16.mxu0 0
    %1295 = vmatpush1.bf16.msra.mxu0 %v1232
    %1296 = vmatprep.subr.bf16.mxu0 0
    %1297 = vmatpush1.bf16.msra.mxu0 %v1231
    %1298 = vmatprep.subr.bf16.mxu0 0
    %1299 = vmatpush1.bf16.msra.mxu0 %v1230
    %1300 = vmatprep.subr.bf16.mxu0 0
    %1301 = vmatpush1.bf16.msra.mxu0 %v1229
    %1302 = vmatprep.subr.bf16.mxu0 0
    %1303 = vmatpush1.bf16.msra.mxu0 %v1228
    %1304 = vmatprep.subr.bf16.mxu0 0
    %1305 = vmatpush1.bf16.msra.mxu0 %v1227
    %1306 = vmatprep.subr.bf16.mxu0 0
    %1307 = vmatpush1.bf16.msra.mxu0 %v1226
    %1308 = vmatprep.subr.bf16.mxu0 0
    %1309 = vmatpush1.bf16.msra.mxu0 %v1225
    %1310 = vmatprep.subr.bf16.mxu0 0
    %1311 = vmatpush2.bf16.msra.mxu0 0
    %1312 = vmatprep.subr.bf16.mxu0 0
    %1313 = vmatpush2.bf16.msra.mxu0 0
    %1314 = vmatprep.subr.bf16.mxu0 0
    %1315 = vmatpush2.bf16.msra.mxu0 0
    %1316 = vmatprep.subr.bf16.mxu0 0
    %1317 = vmatpush2.bf16.msra.mxu0 0
    %1318 = vmatprep.subr.bf16.mxu0 0
    %1319 = vmatpush2.bf16.msra.mxu0 0
    %1320 = vmatprep.subr.bf16.mxu0 0
    %1321 = vmatpush2.bf16.msra.mxu0 0
    %1322 = vmatprep.subr.bf16.mxu0 0
    %1323 = vmatpush2.bf16.msra.mxu0 0
    %1324 = vmatprep.subr.bf16.mxu0 0
    %1325 = vmatpush2.bf16.msra.mxu0 0
    %1326 = vmatprep.mubr.bf16.mxu0 0
    %1327 = vmatmul.mubr.bf16.gmra.mxu0 %v1292
    %v1328 = vpop.f32.mrf.mxu0
    %v1329 = vadd.f32 %v1191, %v1328
    %v1330 = vpop.f32.mrf.mxu0
    %v1331 = vpop.f32.mrf.mxu0
    %v1332 = vadd.f32 %v1191, %v1331
    %v1333 = vpop.f32.mrf.mxu0
    %1334 = vmatprep.mubr.bf16.mxu0 0
    %1335 = vmatmul.mubr.bf16.gmra.mxu0 %v1293
    %v1336 = vpop.f32.mrf.mxu0
    %v1337 = vadd.f32 %v1191, %v1336
    %v1338 = vpop.f32.mrf.mxu0
    %v1339 = vpop.f32.mrf.mxu0
    %v1340 = vpop.f32.mrf.mxu0
    %1341 = vdwg.mxu0
    %v1342 = vtanh.pop %v1329
    %v1343 = vtanh.pop %v1332
    %v1344 = vtanh.pop %v1337
    %v1345 = vld [vmem:[%s18] sm:$0x1]
    %v1347 = vlaneseq
    %v1348 = vshrl.u32 %v1347, 7
    %v1349 = vsub.s32 0, %v1348
    %v1350 = vrot.slane %v1345, %v1349
    %v1352 = vmul.f32 %v1289, %v1350
    %v1353 = vmul.f32 %v1290, %v1350
    %v1354 = vmul.f32 %v1291, %v1350
    %1355 = vadd.xlane.f32.xlu0 %v1352
    %v1356 = vpop.xlane.xlu0 %1355
    %1357 = vadd.xlane.f32.xlu0 %v1353
    %v1358 = vpop.xlane.xlu0 %1357
    %1359 = vadd.xlane.f32.xlu0 %v1354
    %v1360 = vpop.xlane.xlu0 %1359
    %v1361 = vmul.f32 %v1342, %v1350
    %v1362 = vmul.f32 %v1343, %v1350
    %v1363 = vmul.f32 %v1344, %v1350
    %1364 = vadd.xlane.f32.xlu0 %v1361
    %v1365 = vpop.xlane.xlu0 %1364
    %1366 = vadd.xlane.f32.xlu0 %v1362
    %v1367 = vpop.xlane.xlu0 %1366
    %1368 = vadd.xlane.f32.xlu0 %v1363
    %v1369 = vpop.xlane.xlu0 %1368
    %v1370 = vsub.f32 %v1356, %v1365
    %v1371 = vsub.f32 %v1358, %v1367
    %v1372 = vsub.f32 %v1360, %v1369
    %v1373 = vxor.u32 %v1370, 2147483648
    %v1374 = vxor.u32 %v1371, 2147483648
    %v1375 = vxor.u32 %v1372, 2147483648
    %v1376 = vmul.f32 %v1373, 1.442695
    %v1377 = vpow.pop %v1376
    %v1378 = vmul.f32 %v1374, 1.442695
    %v1379 = vpow.pop %v1378
    %v1380 = vmul.f32 %v1375, 1.442695
    %v1381 = vpow.pop %v1380
    %v1382 = vadd.f32 %v1377, 1.0
    %v1383 = vadd.f32 %v1379, 1.0
    %v1384 = vadd.f32 %v1381, 1.0
    %v1385 = vrcp.pop %v1382
    %v1386 = vmul.f32 1.0, %v1385
    %v1387 = vrcp.pop %v1383
    %v1388 = vmul.f32 1.0, %v1387
    %v1389 = vrcp.pop %v1384
    %v1390 = vmul.f32 1.0, %v1389
    %v1391 = vsub.f32 1.0, %v1386
    %v1392 = vsub.f32 1.0, %v1388
    %v1393 = vsub.f32 1.0, %v1390
    %v1394 = vmul.f32 %v1386, %v1162
    %v1395 = vmul.f32 %v1388, %v1163
    %v1396 = vmul.f32 %v1390, %v1164
    %v1397 = vmul.f32 %v1391, %v1165
    %v1398 = vmul.f32 %v1392, %v1166
    %v1399 = vmul.f32 %v1393, %v1167
    %v1400 = vadd.f32 %v1394, %v1397
    %v1401 = vadd.f32 %v1395, %v1398
    %v1402 = vadd.f32 %v1396, %v1399
    %v1403 = vld [vmem:[#allocation31] sm:$0xff]
    %v1404 = vld [vmem:[#allocation31 + $0x8] sm:$0xff]
    %v1405 = vld [vmem:[#allocation31 + $0x10] sm:$0xff]
    %v1406 = vpack.c.bf16 %v1404, %v1403
    %v1407 = vpack.c.bf16 %v1405, %v1405
    %v1408 = vld [vmem:[#allocation25] sm:$0xf]
    %v1409 = vld [vmem:[#allocation25 + $0x4] sm:$0xf]
    %v1410 = vld [vmem:[#allocation25 + $0x8] sm:$0xf]
    %v1411 = vld [vmem:[#allocation25 + $0xc] sm:$0xf]
    %v1412 = vld [vmem:[#allocation25 + $0x10] sm:$0xf]
    %v1413 = vld [vmem:[#allocation25 + $0x14] sm:$0xf]
    %v1414 = vld [vmem:[#allocation25 + $0x18] sm:$0xf]
    %v1415 = vld [vmem:[#allocation25 + $0x1c] sm:$0xf]
    %v1416 = vld [vmem:[#allocation25 + $0x20] sm:$0xf]
    %v1417 = vld [vmem:[#allocation25 + $0x24] sm:$0xf]
    %v1418 = vld [vmem:[#allocation25 + $0x28] sm:$0xf]
    %v1419 = vld [vmem:[#allocation25 + $0x2c] sm:$0xf]
    %v1420 = vld [vmem:[#allocation25 + $0x30] sm:$0xf]
    %v1421 = vld [vmem:[#allocation25 + $0x34] sm:$0xf]
    %v1422 = vld [vmem:[#allocation25 + $0x38] sm:$0xf]
    %v1423 = vld [vmem:[#allocation25 + $0x3c] sm:$0xf]
    %v1424 = vld [vmem:[%s20] sm:$0x1]
    %v1426 = vlaneseq
    %v1427 = vshrl.u32 %v1426, 7
    %v1428 = vsub.s32 0, %v1427
    %v1429 = vrot.slane %v1424, %v1428
    %v1447 = vunpack.c.l.b16 %v1408
    %v1448 = vunpack.c.l.b16 %v1409
    %v1449 = vunpack.c.l.b16 %v1410
    %v1450 = vunpack.c.l.b16 %v1411
    %v1451 = vunpack.c.l.b16 %v1412
    %v1452 = vunpack.c.l.b16 %v1413
    %v1453 = vunpack.c.l.b16 %v1414
    %v1454 = vunpack.c.l.b16 %v1415
    %v1455 = vunpack.c.l.b16 %v1416
    %v1456 = vunpack.c.l.b16 %v1417
    %v1457 = vunpack.c.l.b16 %v1418
    %v1458 = vunpack.c.l.b16 %v1419
    %v1459 = vunpack.c.l.b16 %v1420
    %v1460 = vunpack.c.l.b16 %v1421
    %v1461 = vunpack.c.l.b16 %v1422
    %v1462 = vunpack.c.l.b16 %v1423
    %v1463 = vpack.c.b16 %v1448, %v1447
    %v1464 = vpack.c.b16 %v1450, %v1449
    %v1465 = vpack.c.b16 %v1452, %v1451
    %v1466 = vpack.c.b16 %v1454, %v1453
    %v1467 = vpack.c.b16 %v1456, %v1455
    %v1468 = vpack.c.b16 %v1458, %v1457
    %v1469 = vpack.c.b16 %v1460, %v1459
    %v1470 = vpack.c.b16 %v1462, %v1461
    %1479 = vmatprep.subr.bf16.mxu0 0
    %1480 = vmatpush1.bf16.msra.mxu0 %v1470
    %1481 = vmatprep.subr.bf16.mxu0 0
    %1482 = vmatpush1.bf16.msra.mxu0 %v1469
    %1483 = vmatprep.subr.bf16.mxu0 0
    %1484 = vmatpush1.bf16.msra.mxu0 %v1468
    %1485 = vmatprep.subr.bf16.mxu0 0
    %1486 = vmatpush1.bf16.msra.mxu0 %v1467
    %1487 = vmatprep.subr.bf16.mxu0 0
    %1488 = vmatpush1.bf16.msra.mxu0 %v1466
    %1489 = vmatprep.subr.bf16.mxu0 0
    %1490 = vmatpush1.bf16.msra.mxu0 %v1465
    %1491 = vmatprep.subr.bf16.mxu0 0
    %1492 = vmatpush1.bf16.msra.mxu0 %v1464
    %1493 = vmatprep.subr.bf16.mxu0 0
    %1494 = vmatpush1.bf16.msra.mxu0 %v1463
    %1495 = vmatprep.subr.bf16.mxu0 0
    %1496 = vmatpush2.bf16.msra.mxu0 0
    %1497 = vmatprep.subr.bf16.mxu0 0
    %1498 = vmatpush2.bf16.msra.mxu0 0
    %1499 = vmatprep.subr.bf16.mxu0 0
    %1500 = vmatpush2.bf16.msra.mxu0 0
    %1501 = vmatprep.subr.bf16.mxu0 0
    %1502 = vmatpush2.bf16.msra.mxu0 0
    %1503 = vmatprep.subr.bf16.mxu0 0
    %1504 = vmatpush2.bf16.msra.mxu0 0
    %1505 = vmatprep.subr.bf16.mxu0 0
    %1506 = vmatpush2.bf16.msra.mxu0 0
    %1507 = vmatprep.subr.bf16.mxu0 0
    %1508 = vmatpush2.bf16.msra.mxu0 0
    %1509 = vmatprep.subr.bf16.mxu0 0
    %1510 = vmatpush2.bf16.msra.mxu0 0
    %1511 = vmatprep.mubr.bf16.mxu0 0
    %1512 = vmatmul.mubr.bf16.gmra.mxu0 %v1406
    %v1513 = vpop.f32.mrf.mxu0
    %v1514 = vadd.f32 %v1429, %v1513
    %v1515 = vpop.f32.mrf.mxu0
    %v1516 = vpop.f32.mrf.mxu0
    %v1517 = vadd.f32 %v1429, %v1516
    %v1518 = vpop.f32.mrf.mxu0
    %1519 = vmatprep.mubr.bf16.mxu0 0
    %1520 = vmatmul.mubr.bf16.gmra.mxu0 %v1407
    %v1521 = vpop.f32.mrf.mxu0
    %v1522 = vadd.f32 %v1429, %v1521
    %v1523 = vpop.f32.mrf.mxu0
    %v1524 = vpop.f32.mrf.mxu0
    %v1525 = vpop.f32.mrf.mxu0
    %1526 = vdwg.mxu0
    %v1527 = vxor.u32 %v1514, 2147483648
    %v1528 = vxor.u32 %v1517, 2147483648
    %v1529 = vxor.u32 %v1522, 2147483648
    %v1530 = vmul.f32 %v1527, 1.442695
    %v1531 = vpow.pop %v1530
    %v1532 = vmul.f32 %v1528, 1.442695
    %v1533 = vpow.pop %v1532
    %v1534 = vmul.f32 %v1529, 1.442695
    %v1535 = vpow.pop %v1534
    %v1536 = vadd.f32 %v1531, 1.0
    %v1537 = vadd.f32 %v1533, 1.0
    %v1538 = vadd.f32 %v1535, 1.0
    %v1539 = vrcp.pop %v1536
    %v1540 = vmul.f32 1.0, %v1539
    %v1541 = vrcp.pop %v1537
    %v1542 = vmul.f32 1.0, %v1541
    %v1543 = vrcp.pop %v1538
    %v1544 = vmul.f32 1.0, %v1543
    %v1545 = vld [vmem:[#allocation27] sm:$0xf]
    %v1546 = vld [vmem:[#allocation27 + $0x4] sm:$0xf]
    %v1547 = vld [vmem:[#allocation27 + $0x8] sm:$0xf]
    %v1548 = vld [vmem:[#allocation27 + $0xc] sm:$0xf]
    %v1549 = vld [vmem:[#allocation27 + $0x10] sm:$0xf]
    %v1550 = vld [vmem:[#allocation27 + $0x14] sm:$0xf]
    %v1551 = vld [vmem:[#allocation27 + $0x18] sm:$0xf]
    %v1552 = vld [vmem:[#allocation27 + $0x1c] sm:$0xf]
    %v1553 = vld [vmem:[#allocation27 + $0x20] sm:$0xf]
    %v1554 = vld [vmem:[#allocation27 + $0x24] sm:$0xf]
    %v1555 = vld [vmem:[#allocation27 + $0x28] sm:$0xf]
    %v1556 = vld [vmem:[#allocation27 + $0x2c] sm:$0xf]
    %v1557 = vld [vmem:[#allocation27 + $0x30] sm:$0xf]
    %v1558 = vld [vmem:[#allocation27 + $0x34] sm:$0xf]
    %v1559 = vld [vmem:[#allocation27 + $0x38] sm:$0xf]
    %v1560 = vld [vmem:[#allocation27 + $0x3c] sm:$0xf]
    %v1561 = vld [vmem:[%s22] sm:$0x1]
    %v1563 = vlaneseq
    %v1564 = vshrl.u32 %v1563, 7
    %v1565 = vsub.s32 0, %v1564
    %v1566 = vrot.slane %v1561, %v1565
    %v1584 = vunpack.c.l.b16 %v1545
    %v1585 = vunpack.c.l.b16 %v1546
    %v1586 = vunpack.c.l.b16 %v1547
    %v1587 = vunpack.c.l.b16 %v1548
    %v1588 = vunpack.c.l.b16 %v1549
    %v1589 = vunpack.c.l.b16 %v1550
    %v1590 = vunpack.c.l.b16 %v1551
    %v1591 = vunpack.c.l.b16 %v1552
    %v1592 = vunpack.c.l.b16 %v1553
    %v1593 = vunpack.c.l.b16 %v1554
    %v1594 = vunpack.c.l.b16 %v1555
    %v1595 = vunpack.c.l.b16 %v1556
    %v1596 = vunpack.c.l.b16 %v1557
    %v1597 = vunpack.c.l.b16 %v1558
    %v1598 = vunpack.c.l.b16 %v1559
    %v1599 = vunpack.c.l.b16 %v1560
    %v1600 = vpack.c.b16 %v1585, %v1584
    %v1601 = vpack.c.b16 %v1587, %v1586
    %v1602 = vpack.c.b16 %v1589, %v1588
    %v1603 = vpack.c.b16 %v1591, %v1590
    %v1604 = vpack.c.b16 %v1593, %v1592
    %v1605 = vpack.c.b16 %v1595, %v1594
    %v1606 = vpack.c.b16 %v1597, %v1596
    %v1607 = vpack.c.b16 %v1599, %v1598
    %1616 = vmatprep.subr.bf16.mxu0 0
    %1617 = vmatpush1.bf16.msra.mxu0 %v1607
    %1618 = vmatprep.subr.bf16.mxu0 0
    %1619 = vmatpush1.bf16.msra.mxu0 %v1606
    %1620 = vmatprep.subr.bf16.mxu0 0
    %1621 = vmatpush1.bf16.msra.mxu0 %v1605
    %1622 = vmatprep.subr.bf16.mxu0 0
    %1623 = vmatpush1.bf16.msra.mxu0 %v1604
    %1624 = vmatprep.subr.bf16.mxu0 0
    %1625 = vmatpush1.bf16.msra.mxu0 %v1603
    %1626 = vmatprep.subr.bf16.mxu0 0
    %1627 = vmatpush1.bf16.msra.mxu0 %v1602
    %1628 = vmatprep.subr.bf16.mxu0 0
    %1629 = vmatpush1.bf16.msra.mxu0 %v1601
    %1630 = vmatprep.subr.bf16.mxu0 0
    %1631 = vmatpush1.bf16.msra.mxu0 %v1600
    %1632 = vmatprep.subr.bf16.mxu0 0
    %1633 = vmatpush2.bf16.msra.mxu0 0
    %1634 = vmatprep.subr.bf16.mxu0 0
    %1635 = vmatpush2.bf16.msra.mxu0 0
    %1636 = vmatprep.subr.bf16.mxu0 0
    %1637 = vmatpush2.bf16.msra.mxu0 0
    %1638 = vmatprep.subr.bf16.mxu0 0
    %1639 = vmatpush2.bf16.msra.mxu0 0
    %1640 = vmatprep.subr.bf16.mxu0 0
    %1641 = vmatpush2.bf16.msra.mxu0 0
    %1642 = vmatprep.subr.bf16.mxu0 0
    %1643 = vmatpush2.bf16.msra.mxu0 0
    %1644 = vmatprep.subr.bf16.mxu0 0
    %1645 = vmatpush2.bf16.msra.mxu0 0
    %1646 = vmatprep.subr.bf16.mxu0 0
    %1647 = vmatpush2.bf16.msra.mxu0 0
    %1648 = vmatprep.mubr.bf16.mxu0 0
    %1649 = vmatmul.mubr.bf16.gmra.mxu0 %v1406
    %v1650 = vpop.f32.mrf.mxu0
    %v1651 = vadd.f32 %v1566, %v1650
    %v1652 = vpop.f32.mrf.mxu0
    %v1653 = vpop.f32.mrf.mxu0
    %v1654 = vadd.f32 %v1566, %v1653
    %v1655 = vpop.f32.mrf.mxu0
    %1656 = vmatprep.mubr.bf16.mxu0 0
    %1657 = vmatmul.mubr.bf16.gmra.mxu0 %v1407
    %v1658 = vpop.f32.mrf.mxu0
    %v1659 = vadd.f32 %v1566, %v1658
    %v1660 = vpop.f32.mrf.mxu0
    %v1661 = vpop.f32.mrf.mxu0
    %v1662 = vpop.f32.mrf.mxu0
    %1663 = vdwg.mxu0
    %v1664 = vxor.u32 %v1651, 2147483648
    %v1665 = vxor.u32 %v1654, 2147483648
    %v1666 = vxor.u32 %v1659, 2147483648
    %v1667 = vmul.f32 %v1664, 1.442695
    %v1668 = vpow.pop %v1667
    %v1669 = vmul.f32 %v1665, 1.442695
    %v1670 = vpow.pop %v1669
    %v1671 = vmul.f32 %v1666, 1.442695
    %v1672 = vpow.pop %v1671
    %v1673 = vadd.f32 %v1668, 1.0
    %v1674 = vadd.f32 %v1670, 1.0
    %v1675 = vadd.f32 %v1672, 1.0
    %v1676 = vrcp.pop %v1673
    %v1677 = vmul.f32 1.0, %v1676
    %v1678 = vrcp.pop %v1674
    %v1679 = vmul.f32 1.0, %v1678
    %v1680 = vrcp.pop %v1675
    %v1681 = vmul.f32 1.0, %v1680
    %v1682 = vsub.f32 %v1162, %v1400
    %v1683 = vsub.f32 %v1163, %v1401
    %v1684 = vsub.f32 %v1164, %v1402
    %v1685 = vmul.f32 %v1540, %v1682
    %v1686 = vmul.f32 %v1542, %v1683
    %v1687 = vmul.f32 %v1544, %v1684
    %v1688 = vsub.f32 %v1165, %v1400
    %v1689 = vsub.f32 %v1166, %v1401
    %v1690 = vsub.f32 %v1167, %v1402
    %v1691 = vmul.f32 %v1677, %v1688
    %v1692 = vmul.f32 %v1679, %v1689
    %v1693 = vmul.f32 %v1681, %v1690
    %v1694 = vadd.f32 %v1685, %v1691
    %v1695 = vadd.f32 %v1686, %v1692
    %v1696 = vadd.f32 %v1687, %v1693
    %v1697 = vadd.f32 %v1694, %v1400
    %v1698 = vadd.f32 %v1695, %v1401
    %v1699 = vadd.f32 %v1696, %v1402
    %v1700 = vmul.f32 %v1697, %v959
    %v1701 = vmul.f32 %v1698, %v959
    %v1702 = vmul.f32 %v1699, %v959
    %1703 = vst [vmem:[#allocation29] sm:$0xff] %v1700
    %1704 = vst [vmem:[#allocation29 + $0x8] sm:$0xff] %v1701
    %1705 = vst [vmem:[#allocation29 + $0x10] sm:$0xff] %v1702
    %v1706 = vadd.f32 %v1403, %v1700
    %v1707 = vadd.f32 %v1404, %v1701
    %v1708 = vadd.f32 %v1405, %v1702
    %1709 = vst [vmem:[#allocation28] sm:$0xff] %v1706
    %1710 = vst [vmem:[#allocation28 + $0x8] sm:$0xff] %v1707
    %1711 = vst [vmem:[#allocation28 + $0x10] sm:$0xff] %v1708
    // Predicated region
    $region154: #{tpu_custom_call.1} parent=1 // pred_check
      _
    $region155: #{tpu_custom_call.1} parent=1 // pred_check_branch
      %1713 = sbr.rel (0) target = $region157
    $region156: #{tpu_custom_call.1} parent=1 // pred_region
      %s1715 = ssub.s32 384, 384
      %1716 = vsyncadd [#allocation6], %s1715
      %s1717 = sshll.u32 [#allocation28], 4
      %s1718 = int_to_ptr.vmem [resolvable:$true] %s1717
      %1723 = dma.vmem_to_hbm [thread:$0]  %s1718, 384, %s23, [#allocation6], 128, 128, 8
    $region157: #{tpu_custom_call.1} parent=1 // pred_fallthru
      _
    // Predicated region
    $region158: #{tpu_custom_call.1} parent=1 // pred_check
      _
    $region159: #{tpu_custom_call.1} parent=1 // pred_check_branch
      %1725 = sbr.rel (0) target = $region161
    $region160: #{tpu_custom_call.1} parent=1 // pred_region
      %s1727 = ssub.s32 384, 384
      %1728 = vsyncadd [#allocation30], %s1727
      %s1729 = sshll.u32 [#allocation29], 4
      %s1730 = int_to_ptr.vmem [resolvable:$true] %s1729
      %1735 = dma.vmem_to_hbm [thread:$0]  %s1730, 384, %s24, [#allocation30], 128, 128, 8
    $region161: #{tpu_custom_call.1} parent=1 // pred_fallthru
      _
    // Predicated region
    $region162: #{tpu_custom_call.1} parent=1 // pred_check
      _
    $region163: #{tpu_custom_call.1} parent=1 // pred_check_branch
      %1737 = sbr.rel (0) target = $region165
    $region164: #{tpu_custom_call.1} parent=1 // pred_region
      %s1739 = ssub.s32 384, 384
      %1740 = vsyncadd [#allocation30], %s1739
      %s1741 = sshll.u32 [#allocation31], 4
      %s1742 = int_to_ptr.vmem [resolvable:$true] %s1741
      %1747 = dma.vmem_to_hbm [thread:$0]  %s1742, 384, %s25, [#allocation30], 128, 128, 8
    $region165: #{tpu_custom_call.1} parent=1 // pred_fallthru
      _
    // Predicated region
    $region166: #{tpu_custom_call.1} parent=1 // pred_check
      _
    $region167: #{tpu_custom_call.1} parent=1 // pred_check_branch
      %1749 = sbr.rel (0) target = $region169
    $region168: #{tpu_custom_call.1} parent=1 // pred_region
      %1750 = dma.done [#allocation6], 384
    $region169: #{tpu_custom_call.1} parent=1 // pred_fallthru
      _
    // Predicated region
    $region170: #{tpu_custom_call.1} parent=1 // pred_check
      _
    $region171: #{tpu_custom_call.1} parent=1 // pred_check_branch
      %1752 = sbr.rel (0) target = $region173
    $region172: #{tpu_custom_call.1} parent=1 // pred_region
      %1753 = dma.done [#allocation30], 384
    $region173: #{tpu_custom_call.1} parent=1 // pred_fallthru
      _
    // Predicated region
    $region174: #{tpu_custom_call.1} parent=1 // pred_check
      _
    $region175: #{tpu_custom_call.1} parent=1 // pred_check_branch
      %1755 = sbr.rel (0) target = $region177
    $region176: #{tpu_custom_call.1} parent=1 // pred_region
      %1756 = dma.done [#allocation30], 384
    $region177: #{tpu_custom_call.1} parent=1 // pred_fallthru
      _
    %1757 = vsyncpa [#allocation5], 1
    %1758 = vsyncpa [#allocation8], 1
    %1759 = vsyncpa [#allocation11], 1
    %1760 = vsyncpa [#allocation14], 1
    %1761 = vsyncpa [#allocation17], 1
    %1762 = vsyncpa [#allocation20], 1
    %1763 = vsyncpa [#allocation23], 1
    %1764 = vsyncpa [#allocation26], 1
    %1765 = vsyncpa [#allocation6], 1
    %1766 = vsyncpa [#allocation30], 1

</llo_original>
